<compile_context>
chip_gen: v6e
topology: v6e:2x2x1
jax: 0.10.0
libtpu: 0.0.40
codegen_flags: <defaults>
</compile_context>

<pallas_src>
import functools

import jax
import jax.numpy as jnp
from jax.experimental import pallas as pl
from jax.experimental.pallas import tpu as pltpu

NEG_INF = -1e30                       # f32-safe "-inf" for masked logits
_VMEM_LIMIT = 48 * 1024 * 1024        # < v7x 64 MiB/TC; far below v5e/v6e 128 MiB


def _pick_tile(dim, prefs, cap=512, align=128):
    """Largest preferred tile dividing `dim`. Fallback is capped so odd shapes
    never silently produce an over-VMEM-budget tile (full dim only if <= cap)."""
    for p in prefs:
        if dim % p == 0:
            return p
    if dim <= cap:
        return dim                    # full dim is always a legal block shape
    d = cap
    while d >= align:                 # aligned divisor <= cap
        if dim % d == 0 and d % align == 0:
            return d
        d -= 1
    d = cap                           # last resort: any divisor <= cap
    while dim % d:
        d -= 1
    return d


# ---------------------------------------------------------------------------
# Tiled linear:  y = x @ w_t + b      (w_t pre-transposed: (K, N))
# ---------------------------------------------------------------------------
def _linear_kernel_f32(x_ref, w_ref, b_ref, o_ref):
    # f32 output: accumulate straight into the (k-resident) output block.
    k = pl.program_id(2)

    @pl.when(k == 0)
    def _():
        o_ref[...] = jnp.broadcast_to(b_ref[...], o_ref.shape)

    o_ref[...] += jnp.dot(x_ref[...], w_ref[...],
                          preferred_element_type=jnp.float32)


def _linear_kernel_acc(x_ref, w_ref, b_ref, o_ref, acc_ref):
    # Low-precision output: keep an f32 VMEM accumulator, cast in the epilogue.
    k = pl.program_id(2)

    @pl.when(k == 0)
    def _():
        acc_ref[...] = jnp.broadcast_to(b_ref[...].astype(jnp.float32),
                                        acc_ref.shape)

    acc_ref[...] += jnp.dot(x_ref[...], w_ref[...],
                            preferred_element_type=jnp.float32)

    @pl.when(k == pl.num_programs(2) - 1)
    def _():
        o_ref[...] = acc_ref[...].astype(o_ref.dtype)


def linear(x2, w_t, b):
    """x2: (M, K), w_t: (K, N), b: (N,) -> (M, N)."""
    M, K = x2.shape
    Kw, N = w_t.shape
    assert K == Kw
    tm = _pick_tile(M, (512, 256, 128, 64, 32, 16, 8), cap=512, align=8)
    tn = _pick_tile(N, (512, 256, 128), cap=512, align=128)
    tk = _pick_tile(K, (512, 256, 128), cap=512, align=128)
    b2 = b.reshape(1, N)
    grid = (M // tm, N // tn, K // tk)

    out_is_f32 = x2.dtype == jnp.float32
    kernel = _linear_kernel_f32 if out_is_f32 else _linear_kernel_acc
    scratch = [] if out_is_f32 else [pltpu.VMEM((tm, tn), jnp.float32)]

    itemsize = x2.dtype.itemsize
    cost = pl.CostEstimate(
        flops=2 * M * N * K,
        transcendentals=0,
        bytes_accessed=M * K * itemsize + K * N * w_t.dtype.itemsize
        + M * N * itemsize + N * b.dtype.itemsize,
    )

    return pl.pallas_call(
        kernel,
        out_shape=jax.ShapeDtypeStruct((M, N), x2.dtype),
        grid_spec=pltpu.PrefetchScalarGridSpec(
            num_scalar_prefetch=0,
            grid=grid,
            in_specs=[
                pl.BlockSpec((tm, tk), lambda i, j, k: (i, k)),
                pl.BlockSpec((tk, tn), lambda i, j, k: (k, j)),
                pl.BlockSpec((1, tn), lambda i, j, k: (0, j)),
            ],
            out_specs=pl.BlockSpec((tm, tn), lambda i, j, k: (i, j)),
            scratch_shapes=scratch,
        ),
        compiler_params=pltpu.CompilerParams(
            dimension_semantics=("parallel", "parallel", "arbitrary"),
            vmem_limit_bytes=_VMEM_LIMIT,
        ),
        cost_estimate=cost,
    )(x2, w_t, b2)


# ---------------------------------------------------------------------------
# Causal flash attention over a flattened lower-triangular (qi, ki) grid.
#   q/k/v : (B*H, T, head_dim)    scale = 1 / head_dim  (as in the module)
# ---------------------------------------------------------------------------
def _flash_kernel(qi_tab, ki_tab, q_ref, k_ref, v_ref, o_ref,
                  q_sc, m_sc, l_sc, acc_sc, *, scale, block):
    step = pl.program_id(1)
    qi = qi_tab[step]
    ki = ki_tab[step]

    @pl.when(ki == 0)
    def _init():
        # Fold the softmax scale into q once per q row-block (replaces a
        # (tq,tk) multiply per key block with a (tq,hd) multiply per q block)
        # and hoist the q read out of the key loop.
        q_sc[...] = (q_ref[0] * scale).astype(q_sc.dtype)
        m_sc[...] = jnp.full_like(m_sc, NEG_INF)
        l_sc[...] = jnp.zeros_like(l_sc)
        acc_sc[...] = jnp.zeros_like(acc_sc)

    def update(apply_mask):
        k_mat = k_ref[0]              # native dtype -> MXU, f32 accumulation
        v_mat = v_ref[0]
        s = jax.lax.dot_general(
            q_sc[...], k_mat, (((1,), (1,)), ((), ())),
            preferred_element_type=jnp.float32)          # (tq, tk) f32
        if apply_mask:
            # Diagonal block only (tq == tk): relative indices suffice.
            row = jax.lax.broadcasted_iota(jnp.int32, (block, block), 0)
            col = jax.lax.broadcasted_iota(jnp.int32, (block, block), 1)
            s = jnp.where(col <= row, s, NEG_INF)
        m_prev = m_sc[...]
        m_new = jnp.maximum(m_prev, s.max(axis=-1, keepdims=True))
        alpha = jnp.exp(m_prev - m_new)
        p = jnp.exp(s - m_new)
        l_sc[...] = alpha * l_sc[...] + p.sum(axis=-1, keepdims=True)
        acc_sc[...] = alpha * acc_sc[...] + jnp.dot(
            p.astype(v_mat.dtype), v_mat, preferred_element_type=jnp.float32)
        m_sc[...] = m_new

    @pl.when(ki < qi)                 # fully visible block: no mask work at all
    def _body():
        update(apply_mask=False)

    @pl.when(ki == qi)                # diagonal block: mask, then finalize row
    def _diag():
        update(apply_mask=True)
        l = l_sc[...]
        inv = pl.reciprocal(l, approx=True)   # EUP slot
        inv = inv * (2.0 - l * inv)           # one Newton step on a (tq,1) vec
        o_ref[0] = (acc_sc[...] * inv).astype(o_ref.dtype)


def flash_attention(q, k, v, *, scale):
    BH, T, hd = q.shape
    block = _pick_tile(T, (512, 256, 128, 64, 32, 16, 8), cap=512, align=8)
    nq = T // block

    # Flattened lower-triangular (qi, ki) schedule: only blocks with ki <= qi
    # ever become grid steps, so no DMA / grid-step is wasted on masked blocks.
    qi_list, ki_list = [], []
    for i in range(nq):
        for j in range(i + 1):
            qi_list.append(i)
            ki_list.append(j)
    n_steps = len(qi_list)
    qi_tab = jnp.asarray(qi_list, dtype=jnp.int32)
    ki_tab = jnp.asarray(ki_list, dtype=jnp.int32)

    kernel = functools.partial(_flash_kernel, scale=scale, block=block)
    itemsize = q.dtype.itemsize
    cost = pl.CostEstimate(
        flops=2 * 2 * BH * hd * (T * T) // 2,            # QK^T + PV, causal half
        transcendentals=BH * T * T // 2,                  # exp
        bytes_accessed=(2 * BH * T * hd                   # q read + o write
                        + 2 * BH * n_steps * block * hd)  # k + v reads
        * itemsize,
    )

    grid = (BH, n_steps)
    return pl.pallas_call(
        kernel,
        out_shape=jax.ShapeDtypeStruct((BH, T, hd), q.dtype),
        grid_spec=pltpu.PrefetchScalarGridSpec(
            num_scalar_prefetch=2,
            grid=grid,
            in_specs=[
                pl.BlockSpec((1, block, hd), lambda b, s, qi, ki: (b, qi[s], 0)),
                pl.BlockSpec((1, block, hd), lambda b, s, qi, ki: (b, ki[s], 0)),
                pl.BlockSpec((1, block, hd), lambda b, s, qi, ki: (b, ki[s], 0)),
            ],
            out_specs=pl.BlockSpec((1, block, hd),
                                   lambda b, s, qi, ki: (b, qi[s], 0)),
            scratch_shapes=[
                pltpu.VMEM((block, hd), q.dtype),      # scaled q (per q block)
                pltpu.VMEM((block, 1), jnp.float32),   # running max
                pltpu.VMEM((block, 1), jnp.float32),   # running denom
                pltpu.VMEM((block, hd), jnp.float32),  # accumulator
            ],
        ),
        compiler_params=pltpu.CompilerParams(
            dimension_semantics=("parallel", "arbitrary"),
            vmem_limit_bytes=_VMEM_LIMIT,
        ),
        cost_estimate=cost,
    )(qi_tab, ki_tab, q, k, v)


# ---------------------------------------------------------------------------
# One-time parameter layout prep (module-init time, outside jit): fused QKV
# weight/bias and pre-transposed matrices so the jitted forward never
# concatenates or transposes weights per call.
# ---------------------------------------------------------------------------
def prepare_params(wq, bq, wk, bk, wv, bv, wo, bo):
    w_qkv_t = jnp.concatenate([wq, wk, wv], axis=0).T   # (C, 3C)
    b_qkv = jnp.concatenate([bq, bk, bv], axis=0)       # (3C,)
    wo_t = wo.T                                         # (C, C)
    return w_qkv_t, b_qkv, wo_t, bo


# ---------------------------------------------------------------------------
# Full module forward
# ---------------------------------------------------------------------------
@functools.partial(jax.jit, static_argnames=("num_heads",))
def causal_self_attention(x, w_qkv_t, b_qkv, wo_t, bo, *, num_heads):
    B, T, C = x.shape
    hd = C // num_heads
    x2 = x.reshape(B * T, C)

    # Fused QKV projection: one pass over x instead of three.
    qkv = linear(x2, w_qkv_t, b_qkv)                       # (B*T, 3C)

    # Head split (layout plumbing, one transpose for all of q/k/v).
    qkv = qkv.reshape(B, T, 3, num_heads, hd).transpose(2, 0, 3, 1, 4)
    qkv = qkv.reshape(3, B * num_heads, T, hd)
    q, k, v = qkv[0], qkv[1], qkv[2]

    y = flash_attention(q, k, v, scale=1.0 / hd)           # (B*H, T, hd)

    # Head merge back to (B*T, C).
    y = y.reshape(B, num_heads, T, hd).transpose(0, 2, 1, 3).reshape(B * T, C)
    out = linear(y, wo_t, bo)
    return out.reshape(B, T, C)


# ---------------------------------------------------------------------------
# Pure-JAX reference (mirrors the PyTorch forward)
# ---------------------------------------------------------------------------
def reference_attention(x, wq, bq, wk, bk, wv, bv, wo, bo, num_heads):
    B, T, C = x.shape
    hd = C // num_heads
    q = x @ wq.T + bq
    k = x @ wk.T + bk
    v = x @ wv.T + bv

    def sh(t):
        return t.reshape(B, T, num_heads, hd).transpose(0, 2, 1, 3)

    q, k, v = sh(q), sh(k), sh(v)
    scale = 1.0 / hd
    att = jnp.einsum("bhqd,bhkd->bhqk", q, k) * scale
    mask = jnp.tril(jnp.ones((T, T), dtype=bool))
    att = jnp.where(mask[None, None], att, -jnp.inf)
    att = jax.nn.softmax(att, axis=-1)
    y = jnp.einsum("bhqk,bhkd->bhqd", att, v)
    y = y.transpose(0, 2, 1, 3).reshape(B, T, C)
    return y @ wo.T + bo


if __name__ == "__main__":
    # Small config consistent with the module: embd_dim=32, num_heads=4, T=8.
    B, T, C, num_heads = 2, 8, 32, 4

    key = jax.random.PRNGKey(0)
    ks = jax.random.split(key, 9)
    w_scale = C ** -0.5
    x = jax.random.normal(ks[0], (B, T, C), dtype=jnp.float32)
    wq = w_scale * jax.random.normal(ks[1], (C, C), dtype=jnp.float32)
    wk = w_scale * jax.random.normal(ks[2], (C, C), dtype=jnp.float32)
    wv = w_scale * jax.random.normal(ks[3], (C, C), dtype=jnp.float32)
    wo = w_scale * jax.random.normal(ks[4], (C, C), dtype=jnp.float32)
    bq = 0.1 * jax.random.normal(ks[5], (C,), dtype=jnp.float32)
    bk = 0.1 * jax.random.normal(ks[6], (C,), dtype=jnp.float32)
    bv = 0.1 * jax.random.normal(ks[7], (C,), dtype=jnp.float32)
    bo = 0.1 * jax.random.normal(ks[8], (C,), dtype=jnp.float32)

    # One-time weight layout prep (outside the jitted forward).
    w_qkv_t, b_qkv, wo_t, bo_p = prepare_params(wq, bq, wk, bk, wv, bv, wo, bo)
    jax.block_until_ready((w_qkv_t, b_qkv, wo_t, bo_p))

    out = causal_self_attention(
        x, w_qkv_t, b_qkv, wo_t, bo_p, num_heads=num_heads
    )
    jax.block_until_ready(out)

    ref = reference_attention(x, wq, bq, wk, bk, wv, bv, wo, bo, num_heads)
    assert out.shape == (B, T, C)
    # Tolerance leaves room for the EUP approx-reciprocal (+1 Newton step,
    # ~1e-5 relative) and online-softmax reordering.
    assert jnp.allclose(out, ref, atol=1e-3, rtol=1e-3), (
        float(jnp.max(jnp.abs(out - ref)))
    )

    print("KERNEL_OK")
</pallas_src>

<mosaic_0001>
module attributes {stable_mosaic.version = 11 : i64} {
  func.func @_linear_kernel_f32(%arg0: i32, %arg1: i32, %arg2: i32, %arg3: memref<16x32xf32, #tpu.memory_space<vmem>>, %arg4: memref<32x96xf32, #tpu.memory_space<vmem>>, %arg5: memref<1x96xf32, #tpu.memory_space<vmem>>, %arg6: memref<16x96xf32, #tpu.memory_space<vmem>>) attributes {dimension_semantics = [#tpu.dimension_semantics<parallel>, #tpu.dimension_semantics<parallel>, #tpu.dimension_semantics<arbitrary>], iteration_bounds = array<i64: 1, 1, 1>, scalar_prefetch = 0 : i64, scratch_operands = 0 : i64, tpu.core_type = #tpu.core_type<tc>, window_params = [{transform_indices = @transform_0, window_bounds = array<i64: 16, 32>}, {transform_indices = @transform_1, window_bounds = array<i64: 32, 96>}, {transform_indices = @transform_2, window_bounds = array<i64: 1, 96>}, {transform_indices = @transform_3, window_bounds = array<i64: 16, 96>}]} {
    %c0_i32 = arith.constant 0 : i32
    %0 = arith.cmpi eq, %arg2, %c0_i32 : i32
    %1 = arith.extui %0 : i1 to i32
    %c0_i32_0 = arith.constant 0 : i32
    %2 = arith.cmpi ne, %1, %c0_i32_0 : i32
    scf.if %2 {
      %c0_8 = arith.constant 0 : index
      %c0_9 = arith.constant 0 : index
      %9 = vector.load %arg5[%c0_8, %c0_9] : memref<1x96xf32, #tpu.memory_space<vmem>>, vector<1x96xf32>
      %10 = vector.shape_cast %9 : vector<1x96xf32> to vector<1x96xf32>
      %11 = vector.broadcast %10 : vector<1x96xf32> to vector<16x96xf32>
      %c0_10 = arith.constant 0 : index
      %c0_11 = arith.constant 0 : index
      %12 = vector.load %arg6[%c0_10, %c0_11] : memref<16x96xf32, #tpu.memory_space<vmem>>, vector<16x96xf32>
      tpu.vector_store %arg6[%c0_10, %c0_11], %11 {strides = array<i32>} : memref<16x96xf32, #tpu.memory_space<vmem>>, vector<16x96xf32>,
    } else {
    }
    %c0 = arith.constant 0 : index
    %c0_1 = arith.constant 0 : index
    %3 = vector.load %arg6[%c0, %c0_1] : memref<16x96xf32, #tpu.memory_space<vmem>>, vector<16x96xf32>
    %c0_2 = arith.constant 0 : index
    %c0_3 = arith.constant 0 : index
    %4 = vector.load %arg3[%c0_2, %c0_3] : memref<16x32xf32, #tpu.memory_space<vmem>>, vector<16x32xf32>
    %c0_4 = arith.constant 0 : index
    %c0_5 = arith.constant 0 : index
    %5 = vector.load %arg4[%c0_4, %c0_5] : memref<32x96xf32, #tpu.memory_space<vmem>>, vector<32x96xf32>
    %cst = arith.constant dense<0.000000e+00> : vector<16x96xf32>
    %6 = tpu.matmul %4, %5, %cst {dimension_numbers = #tpu.dot_dimension_numbers<[1], [0], [0], [1], [0, 0, 1, 1], [], []>} : vector<16x32xf32>, vector<32x96xf32>, vector<16x96xf32> -> vector<16x96xf32>
    %7 = arith.addf %3, %6 : vector<16x96xf32>
    %c0_6 = arith.constant 0 : index
    %c0_7 = arith.constant 0 : index
    %8 = vector.load %arg6[%c0_6, %c0_7] : memref<16x96xf32, #tpu.memory_space<vmem>>, vector<16x96xf32>
    tpu.vector_store %arg6[%c0_6, %c0_7], %7 {strides = array<i32>} : memref<16x96xf32, #tpu.memory_space<vmem>>, vector<16x96xf32>,
    return
  }
  func.func @transform_0(%arg0: i32, %arg1: i32, %arg2: i32) -> (i32, i32) {
    %c0_i32 = arith.constant 0 : i32
    return %arg0, %arg2 : i32, i32
  }
  func.func @transform_1(%arg0: i32, %arg1: i32, %arg2: i32) -> (i32, i32) {
    %c0_i32 = arith.constant 0 : i32
    return %arg2, %arg1 : i32, i32
  }
  func.func @transform_2(%arg0: i32, %arg1: i32, %arg2: i32) -> (i32, i32) {
    %c0_i32 = arith.constant 0 : i32
    %c0_i32_0 = arith.constant 0 : i32
    return %c0_i32, %arg1 : i32, i32
  }
  func.func @transform_3(%arg0: i32, %arg1: i32, %arg2: i32) -> (i32, i32) {
    %c0_i32 = arith.constant 0 : i32
    return %arg0, %arg1 : i32, i32
  }
}

module attributes {stable_mosaic.version = 11 : i64} {
  func.func @_linear_kernel_f32(%arg0: i32, %arg1: i32, %arg2: i32, %arg3: memref<16x32xf32, #tpu.memory_space<vmem>>, %arg4: memref<32x32xf32, #tpu.memory_space<vmem>>, %arg5: memref<1x32xf32, #tpu.memory_space<vmem>>, %arg6: memref<16x32xf32, #tpu.memory_space<vmem>>) attributes {dimension_semantics = [#tpu.dimension_semantics<parallel>, #tpu.dimension_semantics<parallel>, #tpu.dimension_semantics<arbitrary>], iteration_bounds = array<i64: 1, 1, 1>, scalar_prefetch = 0 : i64, scratch_operands = 0 : i64, tpu.core_type = #tpu.core_type<tc>, window_params = [{transform_indices = @transform_0, window_bounds = array<i64: 16, 32>}, {transform_indices = @transform_1, window_bounds = array<i64: 32, 32>}, {transform_indices = @transform_2, window_bounds = array<i64: 1, 32>}, {transform_indices = @transform_3, window_bounds = array<i64: 16, 32>}]} {
    %c0_i32 = arith.constant 0 : i32
    %0 = arith.cmpi eq, %arg2, %c0_i32 : i32
    %1 = arith.extui %0 : i1 to i32
    %c0_i32_0 = arith.constant 0 : i32
    %2 = arith.cmpi ne, %1, %c0_i32_0 : i32
    scf.if %2 {
      %c0_8 = arith.constant 0 : index
      %c0_9 = arith.constant 0 : index
      %9 = vector.load %arg5[%c0_8, %c0_9] : memref<1x32xf32, #tpu.memory_space<vmem>>, vector<1x32xf32>
      %10 = vector.shape_cast %9 : vector<1x32xf32> to vector<1x32xf32>
      %11 = vector.broadcast %10 : vector<1x32xf32> to vector<16x32xf32>
      %c0_10 = arith.constant 0 : index
      %c0_11 = arith.constant 0 : index
      %12 = vector.load %arg6[%c0_10, %c0_11] : memref<16x32xf32, #tpu.memory_space<vmem>>, vector<16x32xf32>
      tpu.vector_store %arg6[%c0_10, %c0_11], %11 {strides = array<i32>} : memref<16x32xf32, #tpu.memory_space<vmem>>, vector<16x32xf32>,
    } else {
    }
    %c0 = arith.constant 0 : index
    %c0_1 = arith.constant 0 : index
    %3 = vector.load %arg6[%c0, %c0_1] : memref<16x32xf32, #tpu.memory_space<vmem>>, vector<16x32xf32>
    %c0_2 = arith.constant 0 : index
    %c0_3 = arith.constant 0 : index
    %4 = vector.load %arg3[%c0_2, %c0_3] : memref<16x32xf32, #tpu.memory_space<vmem>>, vector<16x32xf32>
    %c0_4 = arith.constant 0 : index
    %c0_5 = arith.constant 0 : index
    %5 = vector.load %arg4[%c0_4, %c0_5] : memref<32x32xf32, #tpu.memory_space<vmem>>, vector<32x32xf32>
    %cst = arith.constant dense<0.000000e+00> : vector<16x32xf32>
    %6 = tpu.matmul %4, %5, %cst {dimension_numbers = #tpu.dot_dimension_numbers<[1], [0], [0], [1], [0, 0, 1, 1], [], []>} : vector<16x32xf32>, vector<32x32xf32>, vector<16x32xf32> -> vector<16x32xf32>
    %7 = arith.addf %3, %6 : vector<16x32xf32>
    %c0_6 = arith.constant 0 : index
    %c0_7 = arith.constant 0 : index
    %8 = vector.load %arg6[%c0_6, %c0_7] : memref<16x32xf32, #tpu.memory_space<vmem>>, vector<16x32xf32>
    tpu.vector_store %arg6[%c0_6, %c0_7], %7 {strides = array<i32>} : memref<16x32xf32, #tpu.memory_space<vmem>>, vector<16x32xf32>,
    return
  }
  func.func @transform_0(%arg0: i32, %arg1: i32, %arg2: i32) -> (i32, i32) {
    %c0_i32 = arith.constant 0 : i32
    return %arg0, %arg2 : i32, i32
  }
  func.func @transform_1(%arg0: i32, %arg1: i32, %arg2: i32) -> (i32, i32) {
    %c0_i32 = arith.constant 0 : i32
    return %arg2, %arg1 : i32, i32
  }
  func.func @transform_2(%arg0: i32, %arg1: i32, %arg2: i32) -> (i32, i32) {
    %c0_i32 = arith.constant 0 : i32
    %c0_i32_0 = arith.constant 0 : i32
    return %c0_i32, %arg1 : i32, i32
  }
  func.func @transform_3(%arg0: i32, %arg1: i32, %arg2: i32) -> (i32, i32) {
    %c0_i32 = arith.constant 0 : i32
    return %arg0, %arg1 : i32, i32
  }
}

module attributes {stable_mosaic.version = 11 : i64} {
  func.func @_flash_kernel(%arg0: i32, %arg1: i32, %arg2: memref<1xi32, #tpu.memory_space<smem>>, %arg3: memref<1xi32, #tpu.memory_space<smem>>, %arg4: memref<1x8x8xf32, #tpu.memory_space<vmem>>, %arg5: memref<1x8x8xf32, #tpu.memory_space<vmem>>, %arg6: memref<1x8x8xf32, #tpu.memory_space<vmem>>, %arg7: memref<1x8x8xf32, #tpu.memory_space<vmem>>, %arg8: memref<8x8xf32, #tpu.memory_space<vmem>>, %arg9: memref<8x1xf32, #tpu.memory_space<vmem>>, %arg10: memref<8x1xf32, #tpu.memory_space<vmem>>, %arg11: memref<8x8xf32, #tpu.memory_space<vmem>>) attributes {dimension_semantics = [#tpu.dimension_semantics<parallel>, #tpu.dimension_semantics<arbitrary>], iteration_bounds = array<i64: 8, 1>, scalar_prefetch = 2 : i64, scratch_operands = 4 : i64, tpu.core_type = #tpu.core_type<tc>, window_params = [{transform_indices = @transform_0, window_bounds = array<i64: 1, 8, 8>}, {transform_indices = @transform_1, window_bounds = array<i64: 1, 8, 8>}, {transform_indices = @transform_2, window_bounds = array<i64: 1, 8, 8>}, {transform_indices = @transform_3, window_bounds = array<i64: 1, 8, 8>}]} {
    %0 = arith.index_cast %arg1 : i32 to index
    %1 = memref.load %arg2[%0] : memref<1xi32, #tpu.memory_space<smem>>
    %2 = arith.index_cast %arg1 : i32 to index
    %3 = memref.load %arg3[%2] : memref<1xi32, #tpu.memory_space<smem>>
    %c0_i32 = arith.constant 0 : i32
    %4 = arith.cmpi eq, %3, %c0_i32 : i32
    %5 = arith.extui %4 : i1 to i32
    %c0_i32_0 = arith.constant 0 : i32
    %6 = arith.cmpi ne, %5, %c0_i32_0 : i32
    scf.if %6 {
      %c0 = arith.constant 0 : index
      %c0_3 = arith.constant 0 : index
      %c0_4 = arith.constant 0 : index
      %13 = vector.load %arg4[%c0, %c0_3, %c0_4] : memref<1x8x8xf32, #tpu.memory_space<vmem>>, vector<1x8x8xf32>
      %14 = vector.shape_cast %13 : vector<1x8x8xf32> to vector<8x8xf32>
      %cst = arith.constant 1.250000e-01 : f32
      %15 = vector.broadcast %cst : f32 to vector<8x8xf32>
      %16 = arith.mulf %14, %15 : vector<8x8xf32>
      %c0_5 = arith.constant 0 : index
      %c0_6 = arith.constant 0 : index
      %17 = vector.load %arg8[%c0_5, %c0_6] : memref<8x8xf32, #tpu.memory_space<vmem>>, vector<8x8xf32>
      tpu.vector_store %arg8[%c0_5, %c0_6], %16 {strides = array<i32>} : memref<8x8xf32, #tpu.memory_space<vmem>>, vector<8x8xf32>,
      %cst_7 = arith.constant -1.000000e+30 : f32
      %18 = vector.broadcast %cst_7 : f32 to vector<8x1xf32>
      %c0_8 = arith.constant 0 : index
      %c0_9 = arith.constant 0 : index
      %19 = vector.load %arg9[%c0_8, %c0_9] : memref<8x1xf32, #tpu.memory_space<vmem>>, vector<8x1xf32>
      tpu.vector_store %arg9[%c0_8, %c0_9], %18 {strides = array<i32>} : memref<8x1xf32, #tpu.memory_space<vmem>>, vector<8x1xf32>,
      %cst_10 = arith.constant 0.000000e+00 : f32
      %20 = vector.broadcast %cst_10 : f32 to vector<8x1xf32>
      %c0_11 = arith.constant 0 : index
      %c0_12 = arith.constant 0 : index
      %21 = vector.load %arg10[%c0_11, %c0_12] : memref<8x1xf32, #tpu.memory_space<vmem>>, vector<8x1xf32>
      tpu.vector_store %arg10[%c0_11, %c0_12], %20 {strides = array<i32>} : memref<8x1xf32, #tpu.memory_space<vmem>>, vector<8x1xf32>,
      %cst_13 = arith.constant 0.000000e+00 : f32
      %22 = vector.broadcast %cst_13 : f32 to vector<8x8xf32>
      %c0_14 = arith.constant 0 : index
      %c0_15 = arith.constant 0 : index
      %23 = vector.load %arg11[%c0_14, %c0_15] : memref<8x8xf32, #tpu.memory_space<vmem>>, vector<8x8xf32>
      tpu.vector_store %arg11[%c0_14, %c0_15], %22 {strides = array<i32>} : memref<8x8xf32, #tpu.memory_space<vmem>>, vector<8x8xf32>,
    } else {
    }
    %7 = arith.cmpi slt, %3, %1 : i32
    %8 = arith.extui %7 : i1 to i32
    %c0_i32_1 = arith.constant 0 : i32
    %9 = arith.cmpi ne, %8, %c0_i32_1 : i32
    scf.if %9 {
      %c0 = arith.constant 0 : index
      %c0_3 = arith.constant 0 : index
      %c0_4 = arith.constant 0 : index
      %13 = vector.load %arg5[%c0, %c0_3, %c0_4] : memref<1x8x8xf32, #tpu.memory_space<vmem>>, vector<1x8x8xf32>
      %14 = vector.shape_cast %13 : vector<1x8x8xf32> to vector<8x8xf32>
      %c0_5 = arith.constant 0 : index
      %c0_6 = arith.constant 0 : index
      %c0_7 = arith.constant 0 : index
      %15 = vector.load %arg6[%c0_5, %c0_6, %c0_7] : memref<1x8x8xf32, #tpu.memory_space<vmem>>, vector<1x8x8xf32>
      %16 = vector.shape_cast %15 : vector<1x8x8xf32> to vector<8x8xf32>
      %c0_8 = arith.constant 0 : index
      %c0_9 = arith.constant 0 : index
      %17 = vector.load %arg8[%c0_8, %c0_9] : memref<8x8xf32, #tpu.memory_space<vmem>>, vector<8x8xf32>
      %cst = arith.constant dense<0.000000e+00> : vector<8x8xf32>
      %18 = tpu.matmul %17, %14, %cst {dimension_numbers = #tpu.dot_dimension_numbers<[1], [1], [0], [0], [0, 0, 1, 0], [], []>} : vector<8x8xf32>, vector<8x8xf32>, vector<8x8xf32> -> vector<8x8xf32>
      %c0_10 = arith.constant 0 : index
      %c0_11 = arith.constant 0 : index
      %19 = vector.load %arg9[%c0_10, %c0_11] : memref<8x1xf32, #tpu.memory_space<vmem>>, vector<8x1xf32>
      %cst_12 = arith.constant dense<0xFF800000> : vector<8xf32>
      %20 = vector.multi_reduction <maximumf>, %18, %cst_12 [1] : vector<8x8xf32> to vector<8xf32>
      %21 = vector.shape_cast %20 : vector<8xf32> to vector<8x1xf32>
      %22 = arith.maximumf %19, %21 : vector<8x1xf32>
      %23 = arith.subf %19, %22 : vector<8x1xf32>
      %24 = math.exp %23 : vector<8x1xf32>
      %25 = vector.broadcast %22 : vector<8x1xf32> to vector<8x8xf32>
      %26 = arith.subf %18, %25 : vector<8x8xf32>
      %27 = math.exp %26 : vector<8x8xf32>
      %c0_13 = arith.constant 0 : index
      %c0_14 = arith.constant 0 : index
      %28 = vector.load %arg10[%c0_13, %c0_14] : memref<8x1xf32, #tpu.memory_space<vmem>>, vector<8x1xf32>
      %29 = arith.mulf %24, %28 : vector<8x1xf32>
      %cst_15 = arith.constant dense<0.000000e+00> : vector<8xf32>
      %30 = vector.multi_reduction <add>, %27, %cst_15 [1] : vector<8x8xf32> to vector<8xf32>
      %31 = vector.shape_cast %30 : vector<8xf32> to vector<8x1xf32>
      %32 = arith.addf %29, %31 : vector<8x1xf32>
      %c0_16 = arith.constant 0 : index
      %c0_17 = arith.constant 0 : index
      %33 = vector.load %arg10[%c0_16, %c0_17] : memref<8x1xf32, #tpu.memory_space<vmem>>, vector<8x1xf32>
      tpu.vector_store %arg10[%c0_16, %c0_17], %32 {strides = array<i32>} : memref<8x1xf32, #tpu.memory_space<vmem>>, vector<8x1xf32>,
      %c0_18 = arith.constant 0 : index
      %c0_19 = arith.constant 0 : index
      %34 = vector.load %arg11[%c0_18, %c0_19] : memref<8x8xf32, #tpu.memory_space<vmem>>, vector<8x8xf32>
      %35 = vector.broadcast %24 : vector<8x1xf32> to vector<8x8xf32>
      %36 = arith.mulf %35, %34 : vector<8x8xf32>
      %cst_20 = arith.constant dense<0.000000e+00> : vector<8x8xf32>
      %37 = tpu.matmul %27, %16, %cst_20 {dimension_numbers = #tpu.dot_dimension_numbers<[1], [0], [0], [1], [0, 0, 1, 1], [], []>} : vector<8x8xf32>, vector<8x8xf32>, vector<8x8xf32> -> vector<8x8xf32>
      %38 = arith.addf %36, %37 : vector<8x8xf32>
      %c0_21 = arith.constant 0 : index
      %c0_22 = arith.constant 0 : index
      %39 = vector.load %arg11[%c0_21, %c0_22] : memref<8x8xf32, #tpu.memory_space<vmem>>, vector<8x8xf32>
      tpu.vector_store %arg11[%c0_21, %c0_22], %38 {strides = array<i32>} : memref<8x8xf32, #tpu.memory_space<vmem>>, vector<8x8xf32>,
      %c0_23 = arith.constant 0 : index
      %c0_24 = arith.constant 0 : index
      %40 = vector.load %arg9[%c0_23, %c0_24] : memref<8x1xf32, #tpu.memory_space<vmem>>, vector<8x1xf32>
      tpu.vector_store %arg9[%c0_23, %c0_24], %22 {strides = array<i32>} : memref<8x1xf32, #tpu.memory_space<vmem>>, vector<8x1xf32>,
    } else {
    }
    %10 = arith.cmpi eq, %3, %1 : i32
    %11 = arith.extui %10 : i1 to i32
    %c0_i32_2 = arith.constant 0 : i32
    %12 = arith.cmpi ne, %11, %c0_i32_2 : i32
    scf.if %12 {
      %c0 = arith.constant 0 : index
      %c0_3 = arith.constant 0 : index
      %c0_4 = arith.constant 0 : index
      %13 = vector.load %arg5[%c0, %c0_3, %c0_4] : memref<1x8x8xf32, #tpu.memory_space<vmem>>, vector<1x8x8xf32>
      %14 = vector.shape_cast %13 : vector<1x8x8xf32> to vector<8x8xf32>
      %c0_5 = arith.constant 0 : index
      %c0_6 = arith.constant 0 : index
      %c0_7 = arith.constant 0 : index
      %15 = vector.load %arg6[%c0_5, %c0_6, %c0_7] : memref<1x8x8xf32, #tpu.memory_space<vmem>>, vector<1x8x8xf32>
      %16 = vector.shape_cast %15 : vector<1x8x8xf32> to vector<8x8xf32>
      %c0_8 = arith.constant 0 : index
      %c0_9 = arith.constant 0 : index
      %17 = vector.load %arg8[%c0_8, %c0_9] : memref<8x8xf32, #tpu.memory_space<vmem>>, vector<8x8xf32>
      %cst = arith.constant dense<0.000000e+00> : vector<8x8xf32>
      %18 = tpu.matmul %17, %14, %cst {dimension_numbers = #tpu.dot_dimension_numbers<[1], [1], [0], [0], [0, 0, 1, 0], [], []>} : vector<8x8xf32>, vector<8x8xf32>, vector<8x8xf32> -> vector<8x8xf32>
      %19 = tpu.iota {dimensions = array<i32: 0>} : vector<8x8xi32>
      %20 = tpu.iota {dimensions = array<i32: 1>} : vector<8x8xi32>
      %21 = arith.cmpi sle, %20, %19 : vector<8x8xi32>
      %cst_10 = arith.constant -1.000000e+30 : f32
      %22 = vector.broadcast %cst_10 : f32 to vector<8x8xf32>
      %23 = arith.select %21, %18, %22 : vector<8x8xi1>, vector<8x8xf32>
      %c0_11 = arith.constant 0 : index
      %c0_12 = arith.constant 0 : index
      %24 = vector.load %arg9[%c0_11, %c0_12] : memref<8x1xf32, #tpu.memory_space<vmem>>, vector<8x1xf32>
      %cst_13 = arith.constant dense<0xFF800000> : vector<8xf32>
      %25 = vector.multi_reduction <maximumf>, %23, %cst_13 [1] : vector<8x8xf32> to vector<8xf32>
      %26 = vector.shape_cast %25 : vector<8xf32> to vector<8x1xf32>
      %27 = arith.maximumf %24, %26 : vector<8x1xf32>
      %28 = arith.subf %24, %27 : vector<8x1xf32>
      %29 = math.exp %28 : vector<8x1xf32>
      %30 = vector.broadcast %27 : vector<8x1xf32> to vector<8x8xf32>
      %31 = arith.subf %23, %30 : vector<8x8xf32>
      %32 = math.exp %31 : vector<8x8xf32>
      %c0_14 = arith.constant 0 : index
      %c0_15 = arith.constant 0 : index
      %33 = vector.load %arg10[%c0_14, %c0_15] : memref<8x1xf32, #tpu.memory_space<vmem>>, vector<8x1xf32>
      %34 = arith.mulf %29, %33 : vector<8x1xf32>
      %cst_16 = arith.constant dense<0.000000e+00> : vector<8xf32>
      %35 = vector.multi_reduction <add>, %32, %cst_16 [1] : vector<8x8xf32> to vector<8xf32>
      %36 = vector.shape_cast %35 : vector<8xf32> to vector<8x1xf32>
      %37 = arith.addf %34, %36 : vector<8x1xf32>
      %c0_17 = arith.constant 0 : index
      %c0_18 = arith.constant 0 : index
      %38 = vector.load %arg10[%c0_17, %c0_18] : memref<8x1xf32, #tpu.memory_space<vmem>>, vector<8x1xf32>
      tpu.vector_store %arg10[%c0_17, %c0_18], %37 {strides = array<i32>} : memref<8x1xf32, #tpu.memory_space<vmem>>, vector<8x1xf32>,
      %c0_19 = arith.constant 0 : index
      %c0_20 = arith.constant 0 : index
      %39 = vector.load %arg11[%c0_19, %c0_20] : memref<8x8xf32, #tpu.memory_space<vmem>>, vector<8x8xf32>
      %40 = vector.broadcast %29 : vector<8x1xf32> to vector<8x8xf32>
      %41 = arith.mulf %40, %39 : vector<8x8xf32>
      %cst_21 = arith.constant dense<0.000000e+00> : vector<8x8xf32>
      %42 = tpu.matmul %32, %16, %cst_21 {dimension_numbers = #tpu.dot_dimension_numbers<[1], [0], [0], [1], [0, 0, 1, 1], [], []>} : vector<8x8xf32>, vector<8x8xf32>, vector<8x8xf32> -> vector<8x8xf32>
      %43 = arith.addf %41, %42 : vector<8x8xf32>
      %c0_22 = arith.constant 0 : index
      %c0_23 = arith.constant 0 : index
      %44 = vector.load %arg11[%c0_22, %c0_23] : memref<8x8xf32, #tpu.memory_space<vmem>>, vector<8x8xf32>
      tpu.vector_store %arg11[%c0_22, %c0_23], %43 {strides = array<i32>} : memref<8x8xf32, #tpu.memory_space<vmem>>, vector<8x8xf32>,
      %c0_24 = arith.constant 0 : index
      %c0_25 = arith.constant 0 : index
      %45 = vector.load %arg9[%c0_24, %c0_25] : memref<8x1xf32, #tpu.memory_space<vmem>>, vector<8x1xf32>
      tpu.vector_store %arg9[%c0_24, %c0_25], %27 {strides = array<i32>} : memref<8x1xf32, #tpu.memory_space<vmem>>, vector<8x1xf32>,
      %c0_26 = arith.constant 0 : index
      %c0_27 = arith.constant 0 : index
      %46 = vector.load %arg10[%c0_26, %c0_27] : memref<8x1xf32, #tpu.memory_space<vmem>>, vector<8x1xf32>
      %47 = tpu.reciprocal %46 {approx = true} : vector<8x1xf32> -> vector<8x1xf32>
      %48 = arith.mulf %46, %47 : vector<8x1xf32>
      %cst_28 = arith.constant 2.000000e+00 : f32
      %49 = vector.broadcast %cst_28 : f32 to vector<8x1xf32>
      %50 = arith.subf %49, %48 : vector<8x1xf32>
      %51 = arith.mulf %47, %50 : vector<8x1xf32>
      %c0_29 = arith.constant 0 : index
      %c0_30 = arith.constant 0 : index
      %52 = vector.load %arg11[%c0_29, %c0_30] : memref<8x8xf32, #tpu.memory_space<vmem>>, vector<8x8xf32>
      %53 = vector.broadcast %51 : vector<8x1xf32> to vector<8x8xf32>
      %54 = arith.mulf %52, %53 : vector<8x8xf32>
      %c0_31 = arith.constant 0 : index
      %c0_32 = arith.constant 0 : index
      %c0_33 = arith.constant 0 : index
      %55 = vector.load %arg7[%c0_31, %c0_32, %c0_33] : memref<1x8x8xf32, #tpu.memory_space<vmem>>, vector<1x8x8xf32>
      %56 = vector.shape_cast %55 : vector<1x8x8xf32> to vector<8x8xf32>
      %57 = vector.shape_cast %54 : vector<8x8xf32> to vector<1x8x8xf32>
      tpu.vector_store %arg7[%c0_31, %c0_32, %c0_33], %57 {strides = array<i32>} : memref<1x8x8xf32, #tpu.memory_space<vmem>>, vector<1x8x8xf32>,
    } else {
    }
    return
  }
  func.func @transform_0(%arg0: i32, %arg1: i32, %arg2: memref<1xi32, #tpu.memory_space<smem>>, %arg3: memref<1xi32, #tpu.memory_space<smem>>) -> (i32, i32, i32) {
    %0 = arith.index_cast %arg1 : i32 to index
    %1 = memref.load %arg2[%0] : memref<1xi32, #tpu.memory_space<smem>>
    %c0_i32 = arith.constant 0 : i32
    %c0_i32_0 = arith.constant 0 : i32
    return %arg0, %1, %c0_i32 : i32, i32, i32
  }
  func.func @transform_1(%arg0: i32, %arg1: i32, %arg2: memref<1xi32, #tpu.memory_space<smem>>, %arg3: memref<1xi32, #tpu.memory_space<smem>>) -> (i32, i32, i32) {
    %0 = arith.index_cast %arg1 : i32 to index
    %1 = memref.load %arg3[%0] : memref<1xi32, #tpu.memory_space<smem>>
    %c0_i32 = arith.constant 0 : i32
    %c0_i32_0 = arith.constant 0 : i32
    return %arg0, %1, %c0_i32 : i32, i32, i32
  }
  func.func @transform_2(%arg0: i32, %arg1: i32, %arg2: memref<1xi32, #tpu.memory_space<smem>>, %arg3: memref<1xi32, #tpu.memory_space<smem>>) -> (i32, i32, i32) {
    %0 = arith.index_cast %arg1 : i32 to index
    %1 = memref.load %arg3[%0] : memref<1xi32, #tpu.memory_space<smem>>
    %c0_i32 = arith.constant 0 : i32
    %c0_i32_0 = arith.constant 0 : i32
    return %arg0, %1, %c0_i32 : i32, i32, i32
  }
  func.func @transform_3(%arg0: i32, %arg1: i32, %arg2: memref<1xi32, #tpu.memory_space<smem>>, %arg3: memref<1xi32, #tpu.memory_space<smem>>) -> (i32, i32, i32) {
    %0 = arith.index_cast %arg1 : i32 to index
    %1 = memref.load %arg2[%0] : memref<1xi32, #tpu.memory_space<smem>>
    %c0_i32 = arith.constant 0 : i32
    %c0_i32_0 = arith.constant 0 : i32
    return %arg0, %1, %c0_i32 : i32, i32, i32
  }
}

</mosaic_0001>

<llo_original>
// kernel: causal_self_attention.3
$region0: #{causal_self_attention.3}
  #allocation0 [shape = 'u32[]', space=smem, size = 0x4, offset = 0x4, fixed_abs, tag = 'smem constant byte address 0x4 - core index']
  #allocation1 [shape = 'u32[144,128]{1,0:T(1,128)}', space=vmem, size = 0x12000, scoped, tag = 'internal scratch']
  %s0 = inlined_call_operand.hbm [shape: f32[16,32], index: 0, kind: input, shape index: {}]
  %s1 = inlined_call_operand.hbm [shape: f32[32,96], index: 1, kind: input, shape index: {}]
  %s2 = inlined_call_operand.vmem [shape: f32[1,96], index: 2, kind: input, shape index: {}]
  %s3 = inlined_call_operand.vmem [shape: f32[16,96], index: 3, kind: output, shape index: {}]
  %s4 = sld [smem:[#allocation0]]
  $region34: #{causal_self_attention.3} parent=0
    _
  %s6 = ssub.s32 1, %s4
  %s7 = scalar_select 0, %s6, %s4
  $region1: #{causal_self_attention.3} parent=0
    #allocation2 [shape = 'u8[8192]{0}', space=vmem, size = 0x2000, scoped, tag = 'input window, operand 0, single buffered']
    #allocation3 [shape = 's32[1]{0}', space=sflag, size = 0x4, scoped, tag = 'scoped memory for causal_self_attention.3']
    #allocation4 [shape = 'u8[16384]{0}', space=vmem, size = 0x4000, scoped, tag = 'input window, operand 1, single buffered']
    #allocation5 [shape = 's32[1]{0}', space=sflag, size = 0x4, scoped, tag = 'scoped memory for causal_self_attention.3']
    %8 = vsyncpa [#allocation3], 0
    %9 = vsyncpa [#allocation5], 0
    // Predicated region
    $region2: #{causal_self_attention.3} parent=1 // pred_check
      _
    $region3: #{causal_self_attention.3} parent=1 // pred_check_branch
      %11 = sbr.rel (0) target = $region5
    $region4: #{causal_self_attention.3} parent=1 // pred_region
      %s13 = ssub.s32 256, 256
      %14 = vsyncadd [#allocation3], %s13
      %s15 = sshll.u32 [#allocation2], 4
      %s16 = int_to_ptr.vmem [resolvable:$true] %s15
      %21 = dma.hbm_to_vmem [thread:$0]  %s0, 256, %s16, [#allocation3], 128, 128, 8
    $region5: #{causal_self_attention.3} parent=1 // pred_fallthru
      _
    // Predicated region
    $region6: #{causal_self_attention.3} parent=1 // pred_check
      _
    $region7: #{causal_self_attention.3} parent=1 // pred_check_branch
      %23 = sbr.rel (0) target = $region9
    $region8: #{causal_self_attention.3} parent=1 // pred_region
      %s25 = ssub.s32 512, 512
      %26 = vsyncadd [#allocation5], %s25
      %s27 = sshll.u32 [#allocation4], 4
      %s28 = int_to_ptr.vmem [resolvable:$true] %s27
      %33 = dma.hbm_to_vmem [thread:$0]  %s1, 512, %s28, [#allocation5], 128, 128, 8
    $region9: #{causal_self_attention.3} parent=1 // pred_fallthru
      _
    // Predicated region
    $region10: #{causal_self_attention.3} parent=1 // pred_check
      _
    $region11: #{causal_self_attention.3} parent=1 // pred_check_branch
      %35 = sbr.rel (0) target = $region13
    $region12: #{causal_self_attention.3} parent=1 // pred_region
      _
    $region13: #{causal_self_attention.3} parent=1 // pred_fallthru
      _
    // Predicated region
    $region14: #{causal_self_attention.3} parent=1 // pred_check
      _
    $region15: #{causal_self_attention.3} parent=1 // pred_check_branch
      %37 = sbr.rel (0) target = $region17
    $region16: #{causal_self_attention.3} parent=1 // pred_region
      %38 = dma.done [#allocation3], 256
    $region17: #{causal_self_attention.3} parent=1 // pred_fallthru
      _
    // Predicated region
    $region18: #{causal_self_attention.3} parent=1 // pred_check
      _
    $region19: #{causal_self_attention.3} parent=1 // pred_check_branch
      %40 = sbr.rel (0) target = $region21
    $region20: #{causal_self_attention.3} parent=1 // pred_region
      %41 = dma.done [#allocation5], 512
    $region21: #{causal_self_attention.3} parent=1 // pred_fallthru
      _
    %p42 = scmp.eq.s32.totalorder 0, 0
    // Predicated region
    $region22: #{causal_self_attention.3} parent=1 // pred_check
      %p43 = pneg %p42
    $region23: #{causal_self_attention.3} parent=1 // pred_check_branch
      %45 = sbr.rel (%p43) target = $region25
    $region24: #{causal_self_attention.3} parent=1 // pred_region
      %v46 = vld [vmem:[%s2] sm:$0x1]
      %v48 = vlaneseq
      %v49 = vshrl.u32 %v48, 7
      %v50 = vsub.s32 0, %v49
      %v51 = vrot.slane %v46, %v50
      %vm53 = vcmask 785408
      %54 = vst.msk [vmem:[%s3] sm:$0xff] %vm53, %v51
      %55 = vst.msk [vmem:[%s3 + $0x8] sm:$0xff] %vm53, %v51
    $region25: #{causal_self_attention.3} parent=1 // pred_fallthru
      _
    %v56 = vld [vmem:[%s3] sm:$0xff]
    %v57 = vld [vmem:[%s3 + $0x8] sm:$0xff]
    %v58 = vld [vmem:[#allocation2] sm:$0xff]
    %v59 = vld [vmem:[#allocation2 + $0x8] sm:$0xff]
    %v60 = vld [vmem:[#allocation4] sm:$0xff]
    %v61 = vld [vmem:[#allocation4 + $0x8] sm:$0xff]
    %v62 = vld [vmem:[#allocation4 + $0x10] sm:$0xff]
    %v63 = vld [vmem:[#allocation4 + $0x18] sm:$0xff]
    %vm64 = vcmask 261120
    %v66 = vsel %vm64, %v58, 0
    %v69 = vsel %vm64, %v59, 0
    %71 = vmatprep.subr.mxu0 0.0
    %72 = vmatpush1.msra.mxu0 0.0
    %73 = vmatprep.subr.mxu0 0.0
    %74 = vmatpush1.msra.mxu0 0.0
    %75 = vmatprep.subr.mxu0 0.0
    %76 = vmatpush1.msra.mxu0 0.0
    %77 = vmatprep.subr.mxu0 0.0
    %78 = vmatpush1.msra.mxu0 0.0
    %79 = vmatprep.subr.mxu0 0.0
    %80 = vmatpush1.msra.mxu0 0.0
    %81 = vmatprep.subr.mxu0 0.0
    %82 = vmatpush1.msra.mxu0 0.0
    %83 = vmatprep.subr.mxu0 0.0
    %84 = vmatpush1.msra.mxu0 0.0
    %85 = vmatprep.subr.mxu0 0.0
    %86 = vmatpush1.msra.mxu0 0.0
    %87 = vmatprep.subr.mxu0 0.0
    %88 = vmatpush1.msra.mxu0 0.0
    %89 = vmatprep.subr.mxu0 0.0
    %90 = vmatpush1.msra.mxu0 0.0
    %91 = vmatprep.subr.mxu0 0.0
    %92 = vmatpush1.msra.mxu0 0.0
    %93 = vmatprep.subr.mxu0 0.0
    %94 = vmatpush1.msra.mxu0 0.0
    %95 = vmatprep.subr.mxu0 0.0
    %96 = vmatpush1.msra.mxu0 %v63
    %97 = vmatprep.subr.mxu0 0.0
    %98 = vmatpush1.msra.mxu0 %v62
    %99 = vmatprep.subr.mxu0 0.0
    %100 = vmatpush1.msra.mxu0 %v61
    %101 = vmatprep.subr.mxu0 0.0
    %102 = vmatpush1.msra.mxu0 %v60
    %103 = vmatprep.subr.mxu0 0.0
    %104 = vmatpush2.msra.mxu0 0.0
    %105 = vmatprep.subr.mxu0 0.0
    %106 = vmatpush2.msra.mxu0 0.0
    %107 = vmatprep.subr.mxu0 0.0
    %108 = vmatpush2.msra.mxu0 0.0
    %109 = vmatprep.subr.mxu0 0.0
    %110 = vmatpush2.msra.mxu0 0.0
    %111 = vmatprep.subr.mxu0 0.0
    %112 = vmatpush2.msra.mxu0 0.0
    %113 = vmatprep.subr.mxu0 0.0
    %114 = vmatpush2.msra.mxu0 0.0
    %115 = vmatprep.subr.mxu0 0.0
    %116 = vmatpush2.msra.mxu0 0.0
    %117 = vmatprep.subr.mxu0 0.0
    %118 = vmatpush2.msra.mxu0 0.0
    %119 = vmatprep.subr.mxu0 0.0
    %120 = vmatpush2.msra.mxu0 0.0
    %121 = vmatprep.subr.mxu0 0.0
    %122 = vmatpush2.msra.mxu0 0.0
    %123 = vmatprep.subr.mxu0 0.0
    %124 = vmatpush2.msra.mxu0 0.0
    %125 = vmatprep.subr.mxu0 0.0
    %126 = vmatpush2.msra.mxu0 0.0
    %127 = vmatprep.subr.mxu0 0.0
    %128 = vmatpush2.msra.mxu0 0.0
    %129 = vmatprep.subr.mxu0 0.0
    %130 = vmatpush2.msra.mxu0 0.0
    %131 = vmatprep.subr.mxu0 0.0
    %132 = vmatpush2.msra.mxu0 0.0
    %133 = vmatprep.subr.mxu0 0.0
    %134 = vmatpush2.msra.mxu0 0.0
    %135 = vmatprep.mubr.f32.mxu0 0.0
    %136 = vmatmul.mubr.f32.gmra.mxu0 %v66
    %v137 = vpop.f32.mrf.mxu0
    %v138 = vadd.f32 0.0, %v137
    %v139 = vpop.f32.mrf.mxu0
    %140 = vmatprep.mubr.f32.mxu0 0.0
    %141 = vmatmul.mubr.f32.gmra.mxu0 %v69
    %v142 = vpop.f32.mrf.mxu0
    %v143 = vadd.f32 0.0, %v142
    %v144 = vpop.f32.mrf.mxu0
    %145 = vdwg.mxu0
    %v146 = vadd.f32 %v56, %v138
    %v147 = vadd.f32 %v57, %v143
    %vm148 = vcmask 785408
    %149 = vst.msk [vmem:[%s3] sm:$0xff] %vm148, %v146
    %150 = vst.msk [vmem:[%s3 + $0x8] sm:$0xff] %vm148, %v147
    // Predicated region
    $region26: #{causal_self_attention.3} parent=1 // pred_check
      _
    $region27: #{causal_self_attention.3} parent=1 // pred_check_branch
      %152 = sbr.rel (0) target = $region29
    $region28: #{causal_self_attention.3} parent=1 // pred_region
      _
    $region29: #{causal_self_attention.3} parent=1 // pred_fallthru
      _
    // Predicated region
    $region30: #{causal_self_attention.3} parent=1 // pred_check
      _
    $region31: #{causal_self_attention.3} parent=1 // pred_check_branch
      %154 = sbr.rel (0) target = $region33
    $region32: #{causal_self_attention.3} parent=1 // pred_region
      _
    $region33: #{causal_self_attention.3} parent=1 // pred_fallthru
      _
    %155 = vsyncpa [#allocation3], 1
    %156 = vsyncpa [#allocation5], 1

// kernel: causal_self_attention.5
$region0: #{causal_self_attention.5}
  #allocation0 [shape = 'u32[]', space=smem, size = 0x4, offset = 0x4, fixed_abs, tag = 'smem constant byte address 0x4 - core index']
  #allocation1 [shape = 'u32[144,128]{1,0:T(1,128)}', space=vmem, size = 0x12000, scoped, tag = 'internal scratch']
  %s0 = inlined_call_operand.vmem [shape: f32[16,32], index: 0, kind: input, shape index: {}]
  %s1 = inlined_call_operand.vmem [shape: f32[32,32], index: 1, kind: input, shape index: {}]
  %s2 = inlined_call_operand.vmem [shape: f32[1,32], index: 2, kind: input, shape index: {}]
  %s3 = inlined_call_operand.hbm [shape: f32[16,32], index: 3, kind: output, shape index: {}]
  %s4 = sld [smem:[#allocation0]]
  $region26: #{causal_self_attention.5} parent=0
    _
  %s6 = ssub.s32 1, %s4
  %s7 = scalar_select 0, %s6, %s4
  $region1: #{causal_self_attention.5} parent=0
    #allocation2 [shape = 'u8[8192]{0}', space=vmem, size = 0x2000, scoped, tag = 'output window, operand 0, single buffered']
    #allocation3 [shape = 's32[1]{0}', space=sflag, size = 0x4, scoped, tag = 'scoped memory for causal_self_attention.5']
    %8 = vsyncpa [#allocation3], 0
    // Predicated region
    $region2: #{causal_self_attention.5} parent=1 // pred_check
      _
    $region3: #{causal_self_attention.5} parent=1 // pred_check_branch
      %10 = sbr.rel (0) target = $region5
    $region4: #{causal_self_attention.5} parent=1 // pred_region
      _
    $region5: #{causal_self_attention.5} parent=1 // pred_fallthru
      _
    // Predicated region
    $region6: #{causal_self_attention.5} parent=1 // pred_check
      _
    $region7: #{causal_self_attention.5} parent=1 // pred_check_branch
      %12 = sbr.rel (0) target = $region9
    $region8: #{causal_self_attention.5} parent=1 // pred_region
      _
    $region9: #{causal_self_attention.5} parent=1 // pred_fallthru
      _
    // Predicated region
    $region10: #{causal_self_attention.5} parent=1 // pred_check
      _
    $region11: #{causal_self_attention.5} parent=1 // pred_check_branch
      %14 = sbr.rel (0) target = $region13
    $region12: #{causal_self_attention.5} parent=1 // pred_region
      _
    $region13: #{causal_self_attention.5} parent=1 // pred_fallthru
      _
    %p15 = scmp.eq.s32.totalorder 0, 0
    // Predicated region
    $region14: #{causal_self_attention.5} parent=1 // pred_check
      %p16 = pneg %p15
    $region15: #{causal_self_attention.5} parent=1 // pred_check_branch
      %18 = sbr.rel (%p16) target = $region17
    $region16: #{causal_self_attention.5} parent=1 // pred_region
      %v19 = vld [vmem:[%s2] sm:$0x1]
      %v21 = vlaneseq
      %v22 = vshrl.u32 %v21, 7
      %v23 = vsub.s32 0, %v22
      %v24 = vrot.slane %v19, %v23
      %vm26 = vcmask 261120
      %27 = vst.msk [vmem:[#allocation2] sm:$0xff] %vm26, %v24
      %28 = vst.msk [vmem:[#allocation2 + $0x8] sm:$0xff] %vm26, %v24
    $region17: #{causal_self_attention.5} parent=1 // pred_fallthru
      _
    %v29 = vld [vmem:[#allocation2] sm:$0xff]
    %v30 = vld [vmem:[#allocation2 + $0x8] sm:$0xff]
    %v31 = vld [vmem:[%s0] sm:$0xff]
    %v32 = vld [vmem:[%s0 + $0x8] sm:$0xff]
    %v33 = vld [vmem:[%s1] sm:$0xff]
    %v34 = vld [vmem:[%s1 + $0x8] sm:$0xff]
    %v35 = vld [vmem:[%s1 + $0x10] sm:$0xff]
    %v36 = vld [vmem:[%s1 + $0x18] sm:$0xff]
    %vm37 = vcmask 261120
    %v39 = vsel %vm37, %v31, 0
    %v42 = vsel %vm37, %v32, 0
    %44 = vmatprep.subr.mxu0 0.0
    %45 = vmatpush1.msra.mxu0 0.0
    %46 = vmatprep.subr.mxu0 0.0
    %47 = vmatpush1.msra.mxu0 0.0
    %48 = vmatprep.subr.mxu0 0.0
    %49 = vmatpush1.msra.mxu0 0.0
    %50 = vmatprep.subr.mxu0 0.0
    %51 = vmatpush1.msra.mxu0 0.0
    %52 = vmatprep.subr.mxu0 0.0
    %53 = vmatpush1.msra.mxu0 0.0
    %54 = vmatprep.subr.mxu0 0.0
    %55 = vmatpush1.msra.mxu0 0.0
    %56 = vmatprep.subr.mxu0 0.0
    %57 = vmatpush1.msra.mxu0 0.0
    %58 = vmatprep.subr.mxu0 0.0
    %59 = vmatpush1.msra.mxu0 0.0
    %60 = vmatprep.subr.mxu0 0.0
    %61 = vmatpush1.msra.mxu0 0.0
    %62 = vmatprep.subr.mxu0 0.0
    %63 = vmatpush1.msra.mxu0 0.0
    %64 = vmatprep.subr.mxu0 0.0
    %65 = vmatpush1.msra.mxu0 0.0
    %66 = vmatprep.subr.mxu0 0.0
    %67 = vmatpush1.msra.mxu0 0.0
    %68 = vmatprep.subr.mxu0 0.0
    %69 = vmatpush1.msra.mxu0 %v36
    %70 = vmatprep.subr.mxu0 0.0
    %71 = vmatpush1.msra.mxu0 %v35
    %72 = vmatprep.subr.mxu0 0.0
    %73 = vmatpush1.msra.mxu0 %v34
    %74 = vmatprep.subr.mxu0 0.0
    %75 = vmatpush1.msra.mxu0 %v33
    %76 = vmatprep.subr.mxu0 0.0
    %77 = vmatpush2.msra.mxu0 0.0
    %78 = vmatprep.subr.mxu0 0.0
    %79 = vmatpush2.msra.mxu0 0.0
    %80 = vmatprep.subr.mxu0 0.0
    %81 = vmatpush2.msra.mxu0 0.0
    %82 = vmatprep.subr.mxu0 0.0
    %83 = vmatpush2.msra.mxu0 0.0
    %84 = vmatprep.subr.mxu0 0.0
    %85 = vmatpush2.msra.mxu0 0.0
    %86 = vmatprep.subr.mxu0 0.0
    %87 = vmatpush2.msra.mxu0 0.0
    %88 = vmatprep.subr.mxu0 0.0
    %89 = vmatpush2.msra.mxu0 0.0
    %90 = vmatprep.subr.mxu0 0.0
    %91 = vmatpush2.msra.mxu0 0.0
    %92 = vmatprep.subr.mxu0 0.0
    %93 = vmatpush2.msra.mxu0 0.0
    %94 = vmatprep.subr.mxu0 0.0
    %95 = vmatpush2.msra.mxu0 0.0
    %96 = vmatprep.subr.mxu0 0.0
    %97 = vmatpush2.msra.mxu0 0.0
    %98 = vmatprep.subr.mxu0 0.0
    %99 = vmatpush2.msra.mxu0 0.0
    %100 = vmatprep.subr.mxu0 0.0
    %101 = vmatpush2.msra.mxu0 0.0
    %102 = vmatprep.subr.mxu0 0.0
    %103 = vmatpush2.msra.mxu0 0.0
    %104 = vmatprep.subr.mxu0 0.0
    %105 = vmatpush2.msra.mxu0 0.0
    %106 = vmatprep.subr.mxu0 0.0
    %107 = vmatpush2.msra.mxu0 0.0
    %108 = vmatprep.mubr.f32.mxu0 0.0
    %109 = vmatmul.mubr.f32.gmra.mxu0 %v39
    %v110 = vpop.f32.mrf.mxu0
    %v111 = vadd.f32 0.0, %v110
    %v112 = vpop.f32.mrf.mxu0
    %113 = vmatprep.mubr.f32.mxu0 0.0
    %114 = vmatmul.mubr.f32.gmra.mxu0 %v42
    %v115 = vpop.f32.mrf.mxu0
    %v116 = vadd.f32 0.0, %v115
    %v117 = vpop.f32.mrf.mxu0
    %118 = vdwg.mxu0
    %v119 = vadd.f32 %v29, %v111
    %v120 = vadd.f32 %v30, %v116
    %121 = vst.msk [vmem:[#allocation2] sm:$0xff] %vm37, %v119
    %122 = vst.msk [vmem:[#allocation2 + $0x8] sm:$0xff] %vm37, %v120
    // Predicated region
    $region18: #{causal_self_attention.5} parent=1 // pred_check
      _
    $region19: #{causal_self_attention.5} parent=1 // pred_check_branch
      %124 = sbr.rel (0) target = $region21
    $region20: #{causal_self_attention.5} parent=1 // pred_region
      %s126 = ssub.s32 256, 256
      %127 = vsyncadd [#allocation3], %s126
      %s128 = sshll.u32 [#allocation2], 4
      %s129 = int_to_ptr.vmem [resolvable:$true] %s128
      %134 = dma.vmem_to_hbm [thread:$0]  %s129, 256, %s3, [#allocation3], 128, 128, 8
    $region21: #{causal_self_attention.5} parent=1 // pred_fallthru
      _
    // Predicated region
    $region22: #{causal_self_attention.5} parent=1 // pred_check
      _
    $region23: #{causal_self_attention.5} parent=1 // pred_check_branch
      %136 = sbr.rel (0) target = $region25
    $region24: #{causal_self_attention.5} parent=1 // pred_region
      %137 = dma.done [#allocation3], 256
    $region25: #{causal_self_attention.5} parent=1 // pred_fallthru
      _
    %138 = vsyncpa [#allocation3], 1

// kernel: causal_self_attention.4
$region0: #{causal_self_attention.4}
  #allocation0 [shape = 'u32[]', space=smem, size = 0x4, offset = 0x4, fixed_abs, tag = 'smem constant byte address 0x4 - core index']
  #allocation1 [shape = 'u32[144,128]{1,0:T(1,128)}', space=vmem, size = 0x12000, scoped, tag = 'internal scratch']
  #allocation2 [shape = 'f32[8,8]{1,0:T(8,128)}', space=vmem, size = 0x1000, scoped, tag = 'scratch operand']
  #allocation3 [shape = 'f32[8,1]{1,0:T(8,128)}', space=vmem, size = 0x1000, scoped, tag = 'scratch operand']
  #allocation4 [shape = 'f32[8,1]{1,0:T(8,128)}', space=vmem, size = 0x1000, scoped, tag = 'scratch operand']
  #allocation5 [shape = 'f32[8,8]{1,0:T(8,128)}', space=vmem, size = 0x1000, scoped, tag = 'scratch operand']
  #allocation6 [shape = 's32[1]{0}', space=sflag, size = 0x4, scoped, tag = 'scoped memory for causal_self_attention.4']
  #allocation7 [shape = 's32[1]{0:T(128)S(6)}', space=smem, size = 0x200, scoped, tag = 'prefetched SMEM operand 0']
  #allocation8 [shape = 's32[1]{0:T(128)S(6)}', space=smem, size = 0x200, scoped, tag = 'prefetched SMEM operand 1']
  %s0 = inlined_call_operand.<no memory space> [shape: s32[1], index: 0, kind: input, shape index: {}, may-alias: {0,1}]
  %s1 = inlined_call_operand.<no memory space> [shape: s32[1], index: 1, kind: input, shape index: {}, may-alias: {0,1}]
  %s2 = inlined_call_operand.vmem [shape: f32[8,8,8], index: 2, kind: input, shape index: {}]
  %s3 = inlined_call_operand.vmem [shape: f32[8,8,8], index: 3, kind: input, shape index: {}]
  %s4 = inlined_call_operand.vmem [shape: f32[8,8,8], index: 4, kind: input, shape index: {}]
  %s5 = inlined_call_operand.vmem [shape: f32[8,8,8], index: 5, kind: output, shape index: {}]
  %s6 = sld [smem:[#allocation0]]
  $region57: #{causal_self_attention.4} parent=0
    _
  %s8 = ssub.s32 1, %s6
  %s9 = scalar_select 0, %s8, %s6
  %10 = sst [smem:[#allocation7]] %s0
  %11 = sst [smem:[#allocation8]] %s1
  loop: start=0, step=1, limit=10
  $region2: #{causal_self_attention.4} parent=0 // loop_pre_header
    _
  $region3: #{causal_self_attention.4} parent=0 // loop_header
    %s13 = sphi 0, %s17
    %p14 = scmp.ge.s32.totalorder %s13, 10
    %s20 = sphi 0, %s32
    %s21 = sphi 0, %s28
    %s22 = sphi 0, %s20
    %s23 = sphi 0, %s21
    %s24 = sphi 0, %s22
    %s25 = sphi 0, %s23
    %s39 = sphi 0, %s41
    %s42 = sphi 0, %s39
    %s43 = sphi 0, %s42
    %s59 = sphi 0, %s43
    %s69 = sphi 0, %s71
    %s72 = sphi 0, %s69
    %s73 = sphi 0, %s72
    %s89 = sphi 0, %s73
    %s99 = sphi 0, %s101
    %s102 = sphi 0, %s99
    %s103 = sphi 0, %s102
    %s119 = sphi 0, %s103
    %s129 = sphi 0, %s131
    %s132 = sphi 0, %s129
    %s133 = sphi 0, %s132
    %s149 = sphi 0, %s133
  $region4: #{causal_self_attention.4} parent=0 // loop_header_branch
    %16 = sbr.rel (%p14) target = $region8
  $region5: #{causal_self_attention.4} parent=0 // loop_body
    %s18 = ssub.s32 %s13, 1
    %s19 = ssub.s32 %s13, 2
    %s26 = sadd.s32 1, %s21
    %p27 = scmp.ge.s32.totalorder %s26, 1
    %s28 = scalar_select %p27, 0, %s26
    %s29 = sadd.s32 1, %s20
    %s30 = scalar_select %p27, %s29, %s20
    %p31 = scmp.ge.s32.totalorder %s30, 8
    %s32 = scalar_select %p31, 0, %s30
    %s33 = sld [smem:[#allocation7 + %s21]]
    %s34 = sld [smem:[#allocation7 + %s28]]
    %s35 = ssub.s32 %s20, %s32
    %s36 = ssub.s32 %s33, %s34
    %s37 = sor.u32 %s35, %s36
    %p38 = scmp.eq.s32.totalorder %s37, 0
    %s40 = sadd.s32 %s39, 1
    %s41 = scalar_select %p38, %s39, %s40
    %p44 = pneg %p38
    %p45 = scmp.eq.s32.totalorder %s13, 7
    %p46 = por %p44, %p45
    %p47 = scmp.ne.s32.totalorder %s39, %s42
    %p48 = scmp.eq.s32.totalorder %s13, 0
    %p49 = por %p47, %p48
    %p50 = scmp.ne.s32.totalorder %s39, %s42
    %p51 = scmp.eq.s32.totalorder %s18, 7
    %p52 = por %p50, %p51
    %p53 = scmp.ne.s32.totalorder %s42, %s43
    %p54 = scmp.eq.s32.totalorder %s18, 0
    %p55 = por %p53, %p54
    %p56 = scmp.ne.s32.totalorder %s42, %s43
    %p57 = scmp.eq.s32.totalorder %s19, 7
    %p58 = por %p56, %p57
    %p60 = scmp.ne.s32.totalorder %s43, %s59
    %p61 = scmp.eq.s32.totalorder %s19, 0
    %p62 = por %p60, %p61
    %s63 = sld [smem:[#allocation8 + %s21]]
    %s64 = sld [smem:[#allocation8 + %s28]]
    %s65 = ssub.s32 %s20, %s32
    %s66 = ssub.s32 %s63, %s64
    %s67 = sor.u32 %s65, %s66
    %p68 = scmp.eq.s32.totalorder %s67, 0
    %s70 = sadd.s32 %s69, 1
    %s71 = scalar_select %p68, %s69, %s70
    %p74 = pneg %p68
    %p75 = scmp.eq.s32.totalorder %s13, 7
    %p76 = por %p74, %p75
    %p77 = scmp.ne.s32.totalorder %s69, %s72
    %p78 = scmp.eq.s32.totalorder %s13, 0
    %p79 = por %p77, %p78
    %p80 = scmp.ne.s32.totalorder %s69, %s72
    %p81 = scmp.eq.s32.totalorder %s18, 7
    %p82 = por %p80, %p81
    %p83 = scmp.ne.s32.totalorder %s72, %s73
    %p84 = scmp.eq.s32.totalorder %s18, 0
    %p85 = por %p83, %p84
    %p86 = scmp.ne.s32.totalorder %s72, %s73
    %p87 = scmp.eq.s32.totalorder %s19, 7
    %p88 = por %p86, %p87
    %p90 = scmp.ne.s32.totalorder %s73, %s89
    %p91 = scmp.eq.s32.totalorder %s19, 0
    %p92 = por %p90, %p91
    %s93 = sld [smem:[#allocation8 + %s21]]
    %s94 = sld [smem:[#allocation8 + %s28]]
    %s95 = ssub.s32 %s20, %s32
    %s96 = ssub.s32 %s93, %s94
    %s97 = sor.u32 %s95, %s96
    %p98 = scmp.eq.s32.totalorder %s97, 0
    %s100 = sadd.s32 %s99, 1
    %s101 = scalar_select %p98, %s99, %s100
    %p104 = pneg %p98
    %p105 = scmp.eq.s32.totalorder %s13, 7
    %p106 = por %p104, %p105
    %p107 = scmp.ne.s32.totalorder %s99, %s102
    %p108 = scmp.eq.s32.totalorder %s13, 0
    %p109 = por %p107, %p108
    %p110 = scmp.ne.s32.totalorder %s99, %s102
    %p111 = scmp.eq.s32.totalorder %s18, 7
    %p112 = por %p110, %p111
    %p113 = scmp.ne.s32.totalorder %s102, %s103
    %p114 = scmp.eq.s32.totalorder %s18, 0
    %p115 = por %p113, %p114
    %p116 = scmp.ne.s32.totalorder %s102, %s103
    %p117 = scmp.eq.s32.totalorder %s19, 7
    %p118 = por %p116, %p117
    %p120 = scmp.ne.s32.totalorder %s103, %s119
    %p121 = scmp.eq.s32.totalorder %s19, 0
    %p122 = por %p120, %p121
    %s123 = sld [smem:[#allocation7 + %s21]]
    %s124 = sld [smem:[#allocation7 + %s28]]
    %s125 = ssub.s32 %s20, %s32
    %s126 = ssub.s32 %s123, %s124
    %s127 = sor.u32 %s125, %s126
    %p128 = scmp.eq.s32.totalorder %s127, 0
    %s130 = sadd.s32 %s129, 1
    %s131 = scalar_select %p128, %s129, %s130
    %p134 = pneg %p128
    %p135 = scmp.eq.s32.totalorder %s13, 7
    %p136 = por %p134, %p135
    %p137 = scmp.ne.s32.totalorder %s129, %s132
    %p138 = scmp.eq.s32.totalorder %s13, 0
    %p139 = por %p137, %p138
    %p140 = scmp.ne.s32.totalorder %s129, %s132
    %p141 = scmp.eq.s32.totalorder %s18, 7
    %p142 = por %p140, %p141
    %p143 = scmp.ne.s32.totalorder %s132, %s133
    %p144 = scmp.eq.s32.totalorder %s18, 0
    %p145 = por %p143, %p144
    %p146 = scmp.ne.s32.totalorder %s132, %s133
    %p147 = scmp.eq.s32.totalorder %s19, 7
    %p148 = por %p146, %p147
    %p150 = scmp.ne.s32.totalorder %s133, %s149
    %p151 = scmp.eq.s32.totalorder %s19, 0
    %p152 = por %p150, %p151
    %p153 = scmp.le.s32.totalorder 1, %s13
    %p154 = scmp.lt.s32.totalorder %s13, 9
    %p155 = pnand %p153, %p154
    %p156 = pneg %p155
    // Predicated region
    $region9: #{causal_self_attention.4} parent=5 // pred_check
      _
    $region10: #{causal_self_attention.4} parent=5 // pred_check_branch
      %158 = sbr.rel (%p155) target = $region12
    $region11: #{causal_self_attention.4} parent=5 // pred_region
      %s159 = ssub.s32 %s13, 1
    $region12: #{causal_self_attention.4} parent=5 // pred_fallthru
      _
    %p160 = scmp.lt.s32.totalorder %s13, 8
    // Predicated region
    $region13: #{causal_self_attention.4} parent=5 // pred_check
      %p161 = pneg %p160
    $region14: #{causal_self_attention.4} parent=5 // pred_check_branch
      %163 = sbr.rel (%p161) target = $region16
    $region15: #{causal_self_attention.4} parent=5 // pred_region
      // Predicated region
      $region17: #{causal_self_attention.4} parent=15 // pred_check
        %p164 = pneg %p49
      $region18: #{causal_self_attention.4} parent=15 // pred_check_branch
        %166 = sbr.rel (%p164) target = $region20
      $region19: #{causal_self_attention.4} parent=15 // pred_region
        %s167 = sld [smem:[#allocation7 + %s21]]
        %p168 = scmp.lt.s32.totalorder %s20, 7
        %s169 = scalar_select %p168, %s20, 7
        %p170 = scmp.lt.s32.totalorder %s167, 0
        %s171 = scalar_select %p170, %s167, 0
        %s172 = sadd.s32 %s171, %s169
        %s173 = smul.addr %s172, 8
        %s174 = scalar_lea.vmem %s2, %s173
        %s175 = sld [smem:[#allocation7 + %s21]]
      $region20: #{causal_self_attention.4} parent=15 // pred_fallthru
        _
      // Predicated region
      $region21: #{causal_self_attention.4} parent=15 // pred_check
        %p176 = pneg %p79
      $region22: #{causal_self_attention.4} parent=15 // pred_check_branch
        %178 = sbr.rel (%p176) target = $region24
      $region23: #{causal_self_attention.4} parent=15 // pred_region
        %s179 = sld [smem:[#allocation8 + %s21]]
        %p180 = scmp.lt.s32.totalorder %s20, 7
        %s181 = scalar_select %p180, %s20, 7
        %p182 = scmp.lt.s32.totalorder %s179, 0
        %s183 = scalar_select %p182, %s179, 0
        %s184 = sadd.s32 %s183, %s181
        %s185 = smul.addr %s184, 8
        %s186 = scalar_lea.vmem %s3, %s185
        %s187 = sld [smem:[#allocation8 + %s21]]
      $region24: #{causal_self_attention.4} parent=15 // pred_fallthru
        _
      // Predicated region
      $region25: #{causal_self_attention.4} parent=15 // pred_check
        %p188 = pneg %p109
      $region26: #{causal_self_attention.4} parent=15 // pred_check_branch
        %190 = sbr.rel (%p188) target = $region28
      $region27: #{causal_self_attention.4} parent=15 // pred_region
        %s191 = sld [smem:[#allocation8 + %s21]]
        %p192 = scmp.lt.s32.totalorder %s20, 7
        %s193 = scalar_select %p192, %s20, 7
        %p194 = scmp.lt.s32.totalorder %s191, 0
        %s195 = scalar_select %p194, %s191, 0
        %s196 = sadd.s32 %s195, %s193
        %s197 = smul.addr %s196, 8
        %s198 = scalar_lea.vmem %s4, %s197
        %s199 = sld [smem:[#allocation8 + %s21]]
      $region28: #{causal_self_attention.4} parent=15 // pred_fallthru
        _
    $region16: #{causal_self_attention.4} parent=5 // pred_fallthru
      _
    %p200 = scmp.le.s32.totalorder 1, %s13
    %p201 = scmp.lt.s32.totalorder %s13, 9
    %p202 = pnand %p200, %p201
    %p203 = pneg %p202
    // Predicated region
    $region29: #{causal_self_attention.4} parent=5 // pred_check
      _
    $region30: #{causal_self_attention.4} parent=5 // pred_check_branch
      %205 = sbr.rel (%p202) target = $region32
    $region31: #{causal_self_attention.4} parent=5 // pred_region
      %s206 = ssub.s32 %s13, 1
      %s207 = sld [smem:[#allocation7 + %s23]]
      %p208 = scmp.lt.s32.totalorder %s22, 7
      %s209 = scalar_select %p208, %s22, 7
      %p210 = scmp.lt.s32.totalorder %s207, 0
      %s211 = scalar_select %p210, %s207, 0
      %s212 = sadd.s32 %s211, %s209
      %s213 = smul.addr %s212, 8
      %s214 = scalar_lea.vmem %s2, %s213
      %p215 = pneg %p55
      %p216 = pneg %p52
      %s217 = sld [smem:[#allocation8 + %s23]]
      %p218 = scmp.lt.s32.totalorder %s22, 7
      %s219 = scalar_select %p218, %s22, 7
      %p220 = scmp.lt.s32.totalorder %s217, 0
      %s221 = scalar_select %p220, %s217, 0
      %s222 = sadd.s32 %s221, %s219
      %s223 = smul.addr %s222, 8
      %s224 = scalar_lea.vmem %s3, %s223
      %p225 = pneg %p85
      %p226 = pneg %p82
      %s227 = sld [smem:[#allocation8 + %s23]]
      %p228 = scmp.lt.s32.totalorder %s22, 7
      %s229 = scalar_select %p228, %s22, 7
      %p230 = scmp.lt.s32.totalorder %s227, 0
      %s231 = scalar_select %p230, %s227, 0
      %s232 = sadd.s32 %s231, %s229
      %s233 = smul.addr %s232, 8
      %s234 = scalar_lea.vmem %s4, %s233
      %p235 = pneg %p115
      %p236 = pneg %p112
      %p237 = pneg %p145
      %p238 = pneg %p142
      %s239 = sld [smem:[#allocation7 + %s23]]
      %p240 = scmp.lt.s32.totalorder %s22, 7
      %s241 = scalar_select %p240, %s22, 7
      %p242 = scmp.lt.s32.totalorder %s239, 0
      %s243 = scalar_select %p242, %s239, 0
      %s244 = sadd.s32 %s243, %s241
      %s245 = smul.addr %s244, 8
      %s246 = scalar_lea.vmem %s5, %s245
      %s247 = sld [smem:[#allocation7 + %s23]]
      %p248 = scmp.lt.s32.totalorder %s22, 7
      %s249 = scalar_select %p248, %s22, 7
      %p250 = scmp.lt.s32.totalorder %s247, 0
      %s251 = scalar_select %p250, %s247, 0
      %s252 = sadd.s32 %s251, %s249
      %s253 = smul.addr %s252, 8
      %s254 = scalar_lea.vmem %s2, %s253
      %s255 = sld [smem:[#allocation7 + %s23]]
      %s256 = sld [smem:[#allocation8 + %s23]]
      %p257 = scmp.lt.s32.totalorder %s22, 7
      %s258 = scalar_select %p257, %s22, 7
      %p259 = scmp.lt.s32.totalorder %s256, 0
      %s260 = scalar_select %p259, %s256, 0
      %s261 = sadd.s32 %s260, %s258
      %s262 = smul.addr %s261, 8
      %s263 = scalar_lea.vmem %s3, %s262
      %s264 = sld [smem:[#allocation8 + %s23]]
      %s265 = sld [smem:[#allocation8 + %s23]]
      %p266 = scmp.lt.s32.totalorder %s22, 7
      %s267 = scalar_select %p266, %s22, 7
      %p268 = scmp.lt.s32.totalorder %s265, 0
      %s269 = scalar_select %p268, %s265, 0
      %s270 = sadd.s32 %s269, %s267
      %s271 = smul.addr %s270, 8
      %s272 = scalar_lea.vmem %s4, %s271
      %s273 = sld [smem:[#allocation8 + %s23]]
      %s274 = sld [smem:[#allocation7 + %s23]]
      %p275 = scmp.lt.s32.totalorder %s22, 7
      %s276 = scalar_select %p275, %s22, 7
      %p277 = scmp.lt.s32.totalorder %s274, 0
      %s278 = scalar_select %p277, %s274, 0
      %s279 = sadd.s32 %s278, %s276
      %s280 = smul.addr %s279, 8
      %s281 = scalar_lea.vmem %s5, %s280
      %s282 = sld [smem:[#allocation7 + %s23]]
      %s283 = sld [smem:[#allocation7 + %s23]]
      %s284 = sld [smem:[#allocation8 + %s23]]
      %p285 = scmp.eq.s32.totalorder %s284, 0
      // Predicated region
      $region33: #{causal_self_attention.4} parent=31 // pred_check
        %p286 = pneg %p285
      $region34: #{causal_self_attention.4} parent=31 // pred_check_branch
        %288 = sbr.rel (%p286) target = $region36
      $region35: #{causal_self_attention.4} parent=31 // pred_region
        %v289 = vld [vmem:[%s254] sm:$0xff]
        %v290 = vmul.f32 %v289, 0.125
        %vm291 = vcmask 64512
        %292 = vst.msk [vmem:[#allocation2] sm:$0xff] %vm291, %v290
        %vm293 = vcmask 7168
        %294 = vst.msk [vmem:[#allocation3] sm:$0xff] %vm293, -1e+30
        %295 = vst.msk [vmem:[#allocation4] sm:$0xff] %vm293, 0.0
        %296 = vst.msk [vmem:[#allocation5] sm:$0xff] %vm291, 0.0
      $region36: #{causal_self_attention.4} parent=31 // pred_fallthru
        _
      %p297 = scmp.lt.s32.totalorder %s284, %s283
      // Predicated region
      $region37: #{causal_self_attention.4} parent=31 // pred_check
        %p298 = pneg %p297
      $region38: #{causal_self_attention.4} parent=31 // pred_check_branch
        %300 = sbr.rel (%p298) target = $region40
      $region39: #{causal_self_attention.4} parent=31 // pred_region
        %v301 = vld [vmem:[%s263] sm:$0xff]
        %v302 = vld [vmem:[%s272] sm:$0xff]
        %v303 = vld [vmem:[#allocation2] sm:$0xff]
        %vm304 = vcmask 64512
        %v306 = vsel %vm304, %v303, 0
        %v309 = vsel %vm304, %v301, 0
        %311 = vmatprep.subr.mxu0 0.0
        %312 = vmatpush1.xpose.msra.mxu0 0.0
        %313 = vmatprep.subr.mxu0 0.0
        %314 = vmatpush1.xpose.msra.mxu0 0.0
        %315 = vmatprep.subr.mxu0 0.0
        %316 = vmatpush1.xpose.msra.mxu0 0.0
        %317 = vmatprep.subr.mxu0 0.0
        %318 = vmatpush1.xpose.msra.mxu0 0.0
        %319 = vmatprep.subr.mxu0 0.0
        %320 = vmatpush1.xpose.msra.mxu0 0.0
        %321 = vmatprep.subr.mxu0 0.0
        %322 = vmatpush1.xpose.msra.mxu0 0.0
        %323 = vmatprep.subr.mxu0 0.0
        %324 = vmatpush1.xpose.msra.mxu0 0.0
        %325 = vmatprep.subr.mxu0 0.0
        %326 = vmatpush1.xpose.msra.mxu0 0.0
        %327 = vmatprep.subr.mxu0 0.0
        %328 = vmatpush1.xpose.msra.mxu0 0.0
        %329 = vmatprep.subr.mxu0 0.0
        %330 = vmatpush1.xpose.msra.mxu0 0.0
        %331 = vmatprep.subr.mxu0 0.0
        %332 = vmatpush1.xpose.msra.mxu0 0.0
        %333 = vmatprep.subr.mxu0 0.0
        %334 = vmatpush1.xpose.msra.mxu0 0.0
        %335 = vmatprep.subr.mxu0 0.0
        %336 = vmatpush1.xpose.msra.mxu0 0.0
        %337 = vmatprep.subr.mxu0 0.0
        %338 = vmatpush1.xpose.msra.mxu0 0.0
        %339 = vmatprep.subr.mxu0 0.0
        %340 = vmatpush1.xpose.msra.mxu0 0.0
        %341 = vmatprep.subr.mxu0 0.0
        %342 = vmatpush1.xpose.msra.mxu0 %v309
        %343 = vmatprep.subr.mxu0 0.0
        %344 = vmatpush2.xpose.msra.mxu0 0.0
        %345 = vmatprep.subr.mxu0 0.0
        %346 = vmatpush2.xpose.msra.mxu0 0.0
        %347 = vmatprep.subr.mxu0 0.0
        %348 = vmatpush2.xpose.msra.mxu0 0.0
        %349 = vmatprep.subr.mxu0 0.0
        %350 = vmatpush2.xpose.msra.mxu0 0.0
        %351 = vmatprep.subr.mxu0 0.0
        %352 = vmatpush2.xpose.msra.mxu0 0.0
        %353 = vmatprep.subr.mxu0 0.0
        %354 = vmatpush2.xpose.msra.mxu0 0.0
        %355 = vmatprep.subr.mxu0 0.0
        %356 = vmatpush2.xpose.msra.mxu0 0.0
        %357 = vmatprep.subr.mxu0 0.0
        %358 = vmatpush2.xpose.msra.mxu0 0.0
        %359 = vmatprep.subr.mxu0 0.0
        %360 = vmatpush2.xpose.msra.mxu0 0.0
        %361 = vmatprep.subr.mxu0 0.0
        %362 = vmatpush2.xpose.msra.mxu0 0.0
        %363 = vmatprep.subr.mxu0 0.0
        %364 = vmatpush2.xpose.msra.mxu0 0.0
        %365 = vmatprep.subr.mxu0 0.0
        %366 = vmatpush2.xpose.msra.mxu0 0.0
        %367 = vmatprep.subr.mxu0 0.0
        %368 = vmatpush2.xpose.msra.mxu0 0.0
        %369 = vmatprep.subr.mxu0 0.0
        %370 = vmatpush2.xpose.msra.mxu0 0.0
        %371 = vmatprep.subr.mxu0 0.0
        %372 = vmatpush2.xpose.msra.mxu0 0.0
        %373 = vmatprep.subr.mxu0 0.0
        %374 = vmatpush2.xpose.msra.mxu0 0.0
        %375 = vmatprep.mubr.f32.mxu0 0.0
        %376 = vmatmul.mubr.f32.gmra.mxu0 %v306
        %v377 = vpop.f32.mrf.mxu0
        %v378 = vadd.f32 0.0, %v377
        %v379 = vpop.f32.mrf.mxu0
        %380 = vdwg.mxu0
        %v381 = vld [vmem:[#allocation3] sm:$0xff]
        %v382 = vsel %vm304, %v378, -inf
        %383 = vmax.xlane.f32.xlu0 %v382
        %v384 = vpop.xlane.xlu0 %383
        %v385 = vmax.f32 %v381, %v384
        %v386 = vsub.f32 %v381, %v385
        %v387 = vmul.f32 %v386, 1.442695
        %v388 = vpow.pop %v387
        %390 = vset.pattern.permute.xlu0 0
        %391 = vperm.xlu0 %390, %v385
        %v392 = vpop.permute.xlu0 %391
        %v394 = vsub.f32 %v378, %v392
        %v395 = vmul.f32 %v394, 1.442695
        %v396 = vpow.pop %v395
        %v397 = vld [vmem:[#allocation4] sm:$0xff]
        %v398 = vmul.f32 %v388, %v397
        %v399 = vsel %vm304, %v396, 0.0
        %400 = vadd.xlane.f32.xlu0 %v399
        %v401 = vpop.xlane.xlu0 %400
        %v402 = vadd.f32 %v398, %v401
        %vm403 = vcmask 7168
        %404 = vst.msk [vmem:[#allocation4] sm:$0xff] %vm403, %v402
        %v405 = vld [vmem:[#allocation5] sm:$0xff]
        %407 = vset.pattern.permute.xlu0 0
        %408 = vperm.xlu0 %407, %v388
        %v409 = vpop.permute.xlu0 %408
        %v411 = vmul.f32 %v409, %v405
        %v413 = vsel %vm304, %v396, 0
        %415 = vmatprep.subr.mxu0 0.0
        %416 = vmatpush1.msra.mxu0 0.0
        %417 = vmatprep.subr.mxu0 0.0
        %418 = vmatpush1.msra.mxu0 0.0
        %419 = vmatprep.subr.mxu0 0.0
        %420 = vmatpush1.msra.mxu0 0.0
        %421 = vmatprep.subr.mxu0 0.0
        %422 = vmatpush1.msra.mxu0 0.0
        %423 = vmatprep.subr.mxu0 0.0
        %424 = vmatpush1.msra.mxu0 0.0
        %425 = vmatprep.subr.mxu0 0.0
        %426 = vmatpush1.msra.mxu0 0.0
        %427 = vmatprep.subr.mxu0 0.0
        %428 = vmatpush1.msra.mxu0 0.0
        %429 = vmatprep.subr.mxu0 0.0
        %430 = vmatpush1.msra.mxu0 0.0
        %431 = vmatprep.subr.mxu0 0.0
        %432 = vmatpush1.msra.mxu0 0.0
        %433 = vmatprep.subr.mxu0 0.0
        %434 = vmatpush1.msra.mxu0 0.0
        %435 = vmatprep.subr.mxu0 0.0
        %436 = vmatpush1.msra.mxu0 0.0
        %437 = vmatprep.subr.mxu0 0.0
        %438 = vmatpush1.msra.mxu0 0.0
        %439 = vmatprep.subr.mxu0 0.0
        %440 = vmatpush1.msra.mxu0 0.0
        %441 = vmatprep.subr.mxu0 0.0
        %442 = vmatpush1.msra.mxu0 0.0
        %443 = vmatprep.subr.mxu0 0.0
        %444 = vmatpush1.msra.mxu0 0.0
        %445 = vmatprep.subr.mxu0 0.0
        %446 = vmatpush1.msra.mxu0 %v302
        %447 = vmatprep.subr.mxu0 0.0
        %448 = vmatpush2.msra.mxu0 0.0
        %449 = vmatprep.subr.mxu0 0.0
        %450 = vmatpush2.msra.mxu0 0.0
        %451 = vmatprep.subr.mxu0 0.0
        %452 = vmatpush2.msra.mxu0 0.0
        %453 = vmatprep.subr.mxu0 0.0
        %454 = vmatpush2.msra.mxu0 0.0
        %455 = vmatprep.subr.mxu0 0.0
        %456 = vmatpush2.msra.mxu0 0.0
        %457 = vmatprep.subr.mxu0 0.0
        %458 = vmatpush2.msra.mxu0 0.0
        %459 = vmatprep.subr.mxu0 0.0
        %460 = vmatpush2.msra.mxu0 0.0
        %461 = vmatprep.subr.mxu0 0.0
        %462 = vmatpush2.msra.mxu0 0.0
        %463 = vmatprep.subr.mxu0 0.0
        %464 = vmatpush2.msra.mxu0 0.0
        %465 = vmatprep.subr.mxu0 0.0
        %466 = vmatpush2.msra.mxu0 0.0
        %467 = vmatprep.subr.mxu0 0.0
        %468 = vmatpush2.msra.mxu0 0.0
        %469 = vmatprep.subr.mxu0 0.0
        %470 = vmatpush2.msra.mxu0 0.0
        %471 = vmatprep.subr.mxu0 0.0
        %472 = vmatpush2.msra.mxu0 0.0
        %473 = vmatprep.subr.mxu0 0.0
        %474 = vmatpush2.msra.mxu0 0.0
        %475 = vmatprep.subr.mxu0 0.0
        %476 = vmatpush2.msra.mxu0 0.0
        %477 = vmatprep.subr.mxu0 0.0
        %478 = vmatpush2.msra.mxu0 0.0
        %479 = vmatprep.mubr.f32.mxu0 0.0
        %480 = vmatmul.mubr.f32.gmra.mxu0 %v413
        %v481 = vpop.f32.mrf.mxu0
        %v482 = vadd.f32 0.0, %v481
        %v483 = vpop.f32.mrf.mxu0
        %484 = vdwg.mxu0
        %v485 = vadd.f32 %v411, %v482
        %486 = vst.msk [vmem:[#allocation5] sm:$0xff] %vm304, %v485
        %487 = vst.msk [vmem:[#allocation3] sm:$0xff] %vm403, %v385
      $region40: #{causal_self_attention.4} parent=31 // pred_fallthru
        _
      %p488 = scmp.eq.s32.totalorder %s284, %s283
      // Predicated region
      $region41: #{causal_self_attention.4} parent=31 // pred_check
        %p489 = pneg %p488
      $region42: #{causal_self_attention.4} parent=31 // pred_check_branch
        %491 = sbr.rel (%p489) target = $region44
      $region43: #{causal_self_attention.4} parent=31 // pred_region
        %v492 = vld [vmem:[%s263] sm:$0xff]
        %v493 = vld [vmem:[%s272] sm:$0xff]
        %v494 = vld [vmem:[#allocation2] sm:$0xff]
        %vm495 = vcmask 64512
        %v497 = vsel %vm495, %v494, 0
        %v500 = vsel %vm495, %v492, 0
        %502 = vmatprep.subr.mxu0 0.0
        %503 = vmatpush1.xpose.msra.mxu0 0.0
        %504 = vmatprep.subr.mxu0 0.0
        %505 = vmatpush1.xpose.msra.mxu0 0.0
        %506 = vmatprep.subr.mxu0 0.0
        %507 = vmatpush1.xpose.msra.mxu0 0.0
        %508 = vmatprep.subr.mxu0 0.0
        %509 = vmatpush1.xpose.msra.mxu0 0.0
        %510 = vmatprep.subr.mxu0 0.0
        %511 = vmatpush1.xpose.msra.mxu0 0.0
        %512 = vmatprep.subr.mxu0 0.0
        %513 = vmatpush1.xpose.msra.mxu0 0.0
        %514 = vmatprep.subr.mxu0 0.0
        %515 = vmatpush1.xpose.msra.mxu0 0.0
        %516 = vmatprep.subr.mxu0 0.0
        %517 = vmatpush1.xpose.msra.mxu0 0.0
        %518 = vmatprep.subr.mxu0 0.0
        %519 = vmatpush1.xpose.msra.mxu0 0.0
        %520 = vmatprep.subr.mxu0 0.0
        %521 = vmatpush1.xpose.msra.mxu0 0.0
        %522 = vmatprep.subr.mxu0 0.0
        %523 = vmatpush1.xpose.msra.mxu0 0.0
        %524 = vmatprep.subr.mxu0 0.0
        %525 = vmatpush1.xpose.msra.mxu0 0.0
        %526 = vmatprep.subr.mxu0 0.0
        %527 = vmatpush1.xpose.msra.mxu0 0.0
        %528 = vmatprep.subr.mxu0 0.0
        %529 = vmatpush1.xpose.msra.mxu0 0.0
        %530 = vmatprep.subr.mxu0 0.0
        %531 = vmatpush1.xpose.msra.mxu0 0.0
        %532 = vmatprep.subr.mxu0 0.0
        %533 = vmatpush1.xpose.msra.mxu0 %v500
        %534 = vmatprep.subr.mxu0 0.0
        %535 = vmatpush2.xpose.msra.mxu0 0.0
        %536 = vmatprep.subr.mxu0 0.0
        %537 = vmatpush2.xpose.msra.mxu0 0.0
        %538 = vmatprep.subr.mxu0 0.0
        %539 = vmatpush2.xpose.msra.mxu0 0.0
        %540 = vmatprep.subr.mxu0 0.0
        %541 = vmatpush2.xpose.msra.mxu0 0.0
        %542 = vmatprep.subr.mxu0 0.0
        %543 = vmatpush2.xpose.msra.mxu0 0.0
        %544 = vmatprep.subr.mxu0 0.0
        %545 = vmatpush2.xpose.msra.mxu0 0.0
        %546 = vmatprep.subr.mxu0 0.0
        %547 = vmatpush2.xpose.msra.mxu0 0.0
        %548 = vmatprep.subr.mxu0 0.0
        %549 = vmatpush2.xpose.msra.mxu0 0.0
        %550 = vmatprep.subr.mxu0 0.0
        %551 = vmatpush2.xpose.msra.mxu0 0.0
        %552 = vmatprep.subr.mxu0 0.0
        %553 = vmatpush2.xpose.msra.mxu0 0.0
        %554 = vmatprep.subr.mxu0 0.0
        %555 = vmatpush2.xpose.msra.mxu0 0.0
        %556 = vmatprep.subr.mxu0 0.0
        %557 = vmatpush2.xpose.msra.mxu0 0.0
        %558 = vmatprep.subr.mxu0 0.0
        %559 = vmatpush2.xpose.msra.mxu0 0.0
        %560 = vmatprep.subr.mxu0 0.0
        %561 = vmatpush2.xpose.msra.mxu0 0.0
        %562 = vmatprep.subr.mxu0 0.0
        %563 = vmatpush2.xpose.msra.mxu0 0.0
        %564 = vmatprep.subr.mxu0 0.0
        %565 = vmatpush2.xpose.msra.mxu0 0.0
        %566 = vmatprep.mubr.f32.mxu0 0.0
        %567 = vmatmul.mubr.f32.gmra.mxu0 %v497
        %v568 = vpop.f32.mrf.mxu0
        %v569 = vadd.f32 0.0, %v568
        %v570 = vpop.f32.mrf.mxu0
        %571 = vdwg.mxu0
        %v572 = vlaneseq
        %v573 = vshrl.u32 %v572, 7
        %v574 = vlaneseq
        %v575 = vand.u32 %v574, 127
        %vm576 = vcmp.le.s32.totalorder %v575, %v573
        %v577 = vsel %vm576, %v569, -1e+30
        %v578 = vld [vmem:[#allocation3] sm:$0xff]
        %v579 = vsel %vm495, %v577, -inf
        %580 = vmax.xlane.f32.xlu0 %v579
        %v581 = vpop.xlane.xlu0 %580
        %v582 = vmax.f32 %v578, %v581
        %v583 = vsub.f32 %v578, %v582
        %v584 = vmul.f32 %v583, 1.442695
        %v585 = vpow.pop %v584
        %587 = vset.pattern.permute.xlu0 0
        %588 = vperm.xlu0 %587, %v582
        %v589 = vpop.permute.xlu0 %588
        %v591 = vsub.f32 %v577, %v589
        %v592 = vmul.f32 %v591, 1.442695
        %v593 = vpow.pop %v592
        %v594 = vld [vmem:[#allocation4] sm:$0xff]
        %v595 = vmul.f32 %v585, %v594
        %v596 = vsel %vm495, %v593, 0.0
        %597 = vadd.xlane.f32.xlu0 %v596
        %v598 = vpop.xlane.xlu0 %597
        %v599 = vadd.f32 %v595, %v598
        %vm600 = vcmask 7168
        %601 = vst.msk [vmem:[#allocation4] sm:$0xff] %vm600, %v599
        %v602 = vld [vmem:[#allocation5] sm:$0xff]
        %604 = vset.pattern.permute.xlu0 0
        %605 = vperm.xlu0 %604, %v585
        %v606 = vpop.permute.xlu0 %605
        %v608 = vmul.f32 %v606, %v602
        %v610 = vsel %vm495, %v593, 0
        %612 = vmatprep.subr.mxu0 0.0
        %613 = vmatpush1.msra.mxu0 0.0
        %614 = vmatprep.subr.mxu0 0.0
        %615 = vmatpush1.msra.mxu0 0.0
        %616 = vmatprep.subr.mxu0 0.0
        %617 = vmatpush1.msra.mxu0 0.0
        %618 = vmatprep.subr.mxu0 0.0
        %619 = vmatpush1.msra.mxu0 0.0
        %620 = vmatprep.subr.mxu0 0.0
        %621 = vmatpush1.msra.mxu0 0.0
        %622 = vmatprep.subr.mxu0 0.0
        %623 = vmatpush1.msra.mxu0 0.0
        %624 = vmatprep.subr.mxu0 0.0
        %625 = vmatpush1.msra.mxu0 0.0
        %626 = vmatprep.subr.mxu0 0.0
        %627 = vmatpush1.msra.mxu0 0.0
        %628 = vmatprep.subr.mxu0 0.0
        %629 = vmatpush1.msra.mxu0 0.0
        %630 = vmatprep.subr.mxu0 0.0
        %631 = vmatpush1.msra.mxu0 0.0
        %632 = vmatprep.subr.mxu0 0.0
        %633 = vmatpush1.msra.mxu0 0.0
        %634 = vmatprep.subr.mxu0 0.0
        %635 = vmatpush1.msra.mxu0 0.0
        %636 = vmatprep.subr.mxu0 0.0
        %637 = vmatpush1.msra.mxu0 0.0
        %638 = vmatprep.subr.mxu0 0.0
        %639 = vmatpush1.msra.mxu0 0.0
        %640 = vmatprep.subr.mxu0 0.0
        %641 = vmatpush1.msra.mxu0 0.0
        %642 = vmatprep.subr.mxu0 0.0
        %643 = vmatpush1.msra.mxu0 %v493
        %644 = vmatprep.subr.mxu0 0.0
        %645 = vmatpush2.msra.mxu0 0.0
        %646 = vmatprep.subr.mxu0 0.0
        %647 = vmatpush2.msra.mxu0 0.0
        %648 = vmatprep.subr.mxu0 0.0
        %649 = vmatpush2.msra.mxu0 0.0
        %650 = vmatprep.subr.mxu0 0.0
        %651 = vmatpush2.msra.mxu0 0.0
        %652 = vmatprep.subr.mxu0 0.0
        %653 = vmatpush2.msra.mxu0 0.0
        %654 = vmatprep.subr.mxu0 0.0
        %655 = vmatpush2.msra.mxu0 0.0
        %656 = vmatprep.subr.mxu0 0.0
        %657 = vmatpush2.msra.mxu0 0.0
        %658 = vmatprep.subr.mxu0 0.0
        %659 = vmatpush2.msra.mxu0 0.0
        %660 = vmatprep.subr.mxu0 0.0
        %661 = vmatpush2.msra.mxu0 0.0
        %662 = vmatprep.subr.mxu0 0.0
        %663 = vmatpush2.msra.mxu0 0.0
        %664 = vmatprep.subr.mxu0 0.0
        %665 = vmatpush2.msra.mxu0 0.0
        %666 = vmatprep.subr.mxu0 0.0
        %667 = vmatpush2.msra.mxu0 0.0
        %668 = vmatprep.subr.mxu0 0.0
        %669 = vmatpush2.msra.mxu0 0.0
        %670 = vmatprep.subr.mxu0 0.0
        %671 = vmatpush2.msra.mxu0 0.0
        %672 = vmatprep.subr.mxu0 0.0
        %673 = vmatpush2.msra.mxu0 0.0
        %674 = vmatprep.subr.mxu0 0.0
        %675 = vmatpush2.msra.mxu0 0.0
        %676 = vmatprep.mubr.f32.mxu0 0.0
        %677 = vmatmul.mubr.f32.gmra.mxu0 %v610
        %v678 = vpop.f32.mrf.mxu0
        %v679 = vadd.f32 0.0, %v678
        %v680 = vpop.f32.mrf.mxu0
        %681 = vdwg.mxu0
        %v682 = vadd.f32 %v608, %v679
        %683 = vst.msk [vmem:[#allocation5] sm:$0xff] %vm495, %v682
        %684 = vst.msk [vmem:[#allocation3] sm:$0xff] %vm600, %v582
        %v685 = vld [vmem:[#allocation4] sm:$0xff]
        %v686 = vrcp.pop %v685
        %v687 = vmul.f32 %v685, %v686
        %v688 = vsub.f32 2.0, %v687
        %v689 = vmul.f32 %v686, %v688
        %v690 = vld [vmem:[#allocation5] sm:$0xff]
        %692 = vset.pattern.permute.xlu0 0
        %693 = vperm.xlu0 %692, %v689
        %v694 = vpop.permute.xlu0 %693
        %v696 = vmul.f32 %v690, %v694
        %697 = vst.msk [vmem:[%s281] sm:$0xff] %vm495, %v696
      $region44: #{causal_self_attention.4} parent=31 // pred_fallthru
        _
      %s698 = sld [smem:[#allocation7 + %s23]]
      %p699 = scmp.lt.s32.totalorder %s22, 7
      %s700 = scalar_select %p699, %s22, 7
      %p701 = scmp.lt.s32.totalorder %s698, 0
      %s702 = scalar_select %p701, %s698, 0
      %s703 = sadd.s32 %s702, %s700
      %s704 = smul.addr %s703, 8
      %s705 = scalar_lea.vmem %s5, %s704
      // Predicated region
      $region45: #{causal_self_attention.4} parent=31 // pred_check
        %p706 = pneg %p142
      $region46: #{causal_self_attention.4} parent=31 // pred_check_branch
        %708 = sbr.rel (%p706) target = $region48
      $region47: #{causal_self_attention.4} parent=31 // pred_region
        %s709 = sld [smem:[#allocation7 + %s23]]
      $region48: #{causal_self_attention.4} parent=31 // pred_fallthru
        _
    $region32: #{causal_self_attention.4} parent=5 // pred_fallthru
      _
    %p710 = scmp.le.s32.totalorder 2, %s13
    // Predicated region
    $region49: #{causal_self_attention.4} parent=5 // pred_check
      %p711 = pneg %p710
    $region50: #{causal_self_attention.4} parent=5 // pred_check_branch
      %713 = sbr.rel (%p711) target = $region52
    $region51: #{causal_self_attention.4} parent=5 // pred_region
      %s714 = ssub.s32 %s13, 2
      // Predicated region
      $region53: #{causal_self_attention.4} parent=51 // pred_check
        %p715 = pneg %p148
      $region54: #{causal_self_attention.4} parent=51 // pred_check_branch
        %717 = sbr.rel (%p715) target = $region56
      $region55: #{causal_self_attention.4} parent=51 // pred_region
        %s718 = sld [smem:[#allocation7 + %s25]]
        %p719 = scmp.lt.s32.totalorder %s24, 7
        %s720 = scalar_select %p719, %s24, 7
        %p721 = scmp.lt.s32.totalorder %s718, 0
        %s722 = scalar_select %p721, %s718, 0
        %s723 = sadd.s32 %s722, %s720
        %s724 = smul.addr %s723, 8
        %s725 = scalar_lea.vmem %s5, %s724
      $region56: #{causal_self_attention.4} parent=51 // pred_fallthru
        _
    $region52: #{causal_self_attention.4} parent=5 // pred_fallthru
      _
  $region6: #{causal_self_attention.4} parent=0 // loop_footer
    %s17 = sadd.s32 1, %s13
  $region7: #{causal_self_attention.4} parent=0 // loop_footer_branch
    %12 = sbr.rel target = $region3
  $region8: #{causal_self_attention.4} parent=0 // loop_exit
    _

</llo_original>
